<compile_context>
chip_gen: v7x
topology: tpu7x:2x2x1
jax: 0.10.0
libtpu: 0.0.40
codegen_flags: <defaults>
</compile_context>

<pallas_src>
import functools

import jax
import jax.numpy as jnp
from jax import lax
from jax.experimental import pallas as pl
from jax.experimental.pallas import tpu as pltpu


def _round_up(x, m):
    return ((x + m - 1) // m) * m


def _pad2(a, rows, cols):
    return jnp.pad(a, ((0, rows - a.shape[0]), (0, cols - a.shape[1])))


def _seq2seq_kernel(
    enc_x_ref,    # (S_enc*B_pad, I_pad)   bf16, time-major, flattened, zero-padded
    dec_x_ref,    # (S_dec*B_pad, Oin_pad) bf16
    h0_ref,       # (B_pad, H_pad)         f32
    w_ih_e_ref,   # (I_pad, H_pad)         bf16  encoder input->hidden (pre-T, padded)
    w_hh_e_ref,   # (H_pad, H_pad)         bf16  encoder hidden->hidden
    b_e_ref,      # (1, H_pad)             f32   encoder combined bias (b_ih + b_hh)
    w_ih_d_ref,   # (Oin_pad, H_pad)       bf16  decoder input->hidden
    w_hh_d_ref,   # (H_pad, H_pad)         bf16  decoder hidden->hidden
    b_d_ref,      # (1, H_pad)             f32   decoder combined bias
    w_fc_ref,     # (H_pad, O_pad)         bf16  fc weight (pre-T, padded)
    b_fc_ref,     # (1, O_pad)             f32   fc bias
    out_ref,      # (S_dec*B_pad, O_pad)   f32   lane-dense output slab
    *,
    s_enc,
    s_dec,
    b_pad,
):
    f32 = jnp.float32
    bf16 = jnp.bfloat16

    w_hh_e = w_hh_e_ref[...]
    w_hh_d = w_hh_d_ref[...]
    w_fc = w_fc_ref[...]
    b_fc = b_fc_ref[...]

    # --- Hoisted input projections: one big bf16 MXU matmul per sequence,
    # f32 accumulation, biases folded in.  (Biases also land on the padded
    # batch rows, so those rows of h are nonzero; they are sliced off in the
    # wrapper and never re-enter any reduction.)
    enc_xp = (
        jnp.dot(enc_x_ref[...], w_ih_e_ref[...], preferred_element_type=f32)
        + b_e_ref[...]
    )  # (S_enc*B_pad, H_pad) f32
    dec_xp = (
        jnp.dot(dec_x_ref[...], w_ih_d_ref[...], preferred_element_type=f32)
        + b_d_ref[...]
    )  # (S_dec*B_pad, H_pad) f32

    # --- Encoder recurrence (statically unrolled; S is small & compile-time).
    # Per step: bf16 h @ bf16 W_hh (single MXU pass, f32 accum) + xp_t, tanh in f32.
    h = h0_ref[...]
    hb = h.astype(bf16)
    for t in range(s_enc):
        xp_t = enc_xp[t * b_pad:(t + 1) * b_pad, :]
        h = jnp.tanh(xp_t + jnp.dot(hb, w_hh_e, preferred_element_type=f32))
        hb = h.astype(bf16)

    # --- Decoder recurrence with the FC fused per step.  The per-step
    # 16x128 @ 128xO_pad FC matmul rides in MXU slack and the store is
    # lane-dense (O_pad multiple of 128) -> unmasked vst, no scratch slab.
    for t in range(s_dec):
        xp_t = dec_xp[t * b_pad:(t + 1) * b_pad, :]
        h = jnp.tanh(xp_t + jnp.dot(hb, w_hh_d, preferred_element_type=f32))
        hb = h.astype(bf16)
        out_ref[t * b_pad:(t + 1) * b_pad, :] = (
            jnp.dot(hb, w_fc, preferred_element_type=f32) + b_fc
        )


def seq2seq_forward(enc_input, enc_hidden, dec_input, params):
    """enc_input: (B, S_enc, I), enc_hidden: (1, B, H), dec_input: (B, S_dec, O).
    Returns (S_dec, B, O), matching the PyTorch module (time-major output)."""
    B, S_enc, I = enc_input.shape
    _, S_dec, O = dec_input.shape
    H = enc_hidden.shape[-1]

    # Padded (vreg / MXU friendly) dimensions.  B padded to 16 sublanes: a bf16
    # vreg is (16, 128), so the bf16 LHS tiles are fully packed.
    B_pad = _round_up(B, 16)
    H_pad = _round_up(H, 128)
    I_pad = _round_up(I, 128)
    O_pad = _round_up(O, 128)

    f32 = jnp.float32
    bf16 = jnp.bfloat16

    # Glue: time-major layout, zero-pad once, flatten (S, B_pad) -> S*B_pad, bf16.
    def prep_seq(x, s, feat_pad):
        x = jnp.transpose(x, (1, 0, 2)).astype(f32)                         # (S, B, F)
        x = jnp.pad(x, ((0, 0), (0, B_pad - B), (0, feat_pad - x.shape[2])))
        return x.reshape(s * B_pad, feat_pad).astype(bf16)

    enc_x = prep_seq(enc_input, S_enc, I_pad)        # (S_enc*B_pad, I_pad) bf16
    dec_x = prep_seq(dec_input, S_dec, O_pad)        # (S_dec*B_pad, O_pad) bf16
    h0 = _pad2(enc_hidden[0].astype(f32), B_pad, H_pad)                     # f32

    # Pre-transposed, zero-padded, bf16-cast weights (padding entries are exact
    # zeros, so padded lanes contribute nothing to any matmul).
    def w_prep(w, rows, cols):
        return _pad2(w.T.astype(f32), rows, cols).astype(bf16)

    w_ih_e = w_prep(params["enc_w_ih"], I_pad, H_pad)
    w_hh_e = w_prep(params["enc_w_hh"], H_pad, H_pad)
    b_e = _pad2((params["enc_b_ih"] + params["enc_b_hh"]).reshape(1, H).astype(f32), 1, H_pad)
    w_ih_d = w_prep(params["dec_w_ih"], O_pad, H_pad)
    w_hh_d = w_prep(params["dec_w_hh"], H_pad, H_pad)
    b_d = _pad2((params["dec_b_ih"] + params["dec_b_hh"]).reshape(1, H).astype(f32), 1, H_pad)
    w_fc = w_prep(params["fc_w"], H_pad, O_pad)
    b_fc = _pad2(params["fc_b"].reshape(1, O).astype(f32), 1, O_pad)

    kernel = functools.partial(_seq2seq_kernel, s_enc=S_enc, s_dec=S_dec, b_pad=B_pad)

    operands = (enc_x, dec_x, h0, w_ih_e, w_hh_e, b_e, w_ih_d, w_hh_d, b_d, w_fc, b_fc)

    # Advisory cost estimate for XLA's scheduler around the custom call.
    flops = 2 * (
        S_enc * B_pad * I_pad * H_pad                 # encoder input projection
        + S_dec * B_pad * O_pad * H_pad               # decoder input projection
        + (S_enc + S_dec) * B_pad * H_pad * H_pad     # recurrences
        + S_dec * B_pad * H_pad * O_pad               # fc
    )
    transcendentals = (S_enc + S_dec) * B_pad * H_pad
    out_bytes = S_dec * B_pad * O_pad * 4
    bytes_accessed = sum(int(a.size) * a.dtype.itemsize for a in operands) + out_bytes

    # Explicit scoped-VMEM budget (v5e default is only 16 MiB; v7x physical is
    # 64 MiB) with headroom, capped well below every generation's physical VMEM.
    vmem_limit = min(max(4 * (bytes_accessed + out_bytes), 8 * 1024 * 1024),
                     48 * 1024 * 1024)

    vmem = pl.BlockSpec(memory_space=pltpu.MemorySpace.VMEM)
    out_pad = pl.pallas_call(
        kernel,
        out_shape=jax.ShapeDtypeStruct((S_dec * B_pad, O_pad), f32),
        in_specs=[vmem] * len(operands),
        out_specs=vmem,
        compiler_params=pltpu.CompilerParams(vmem_limit_bytes=vmem_limit),
        cost_estimate=pl.CostEstimate(
            flops=flops, transcendentals=transcendentals, bytes_accessed=bytes_accessed),
    )(*operands)

    # Strip padding, restore (S_dec, B, O).
    return out_pad.reshape(S_dec, B_pad, O_pad)[:, :B, :O]


def init_params(key, input_size, hidden_size, output_size):
    """Deterministic PyTorch-style init: U(-1/sqrt(H), 1/sqrt(H))."""
    ks = jax.random.split(key, 11)
    bound = 1.0 / jnp.sqrt(hidden_size)

    def u(k, shape):
        return jax.random.uniform(k, shape, jnp.float32, -bound, bound)

    return {
        "enc_w_ih": u(ks[0], (hidden_size, input_size)),
        "enc_w_hh": u(ks[1], (hidden_size, hidden_size)),
        "enc_b_ih": u(ks[2], (hidden_size,)),
        "enc_b_hh": u(ks[3], (hidden_size,)),
        "dec_w_ih": u(ks[4], (hidden_size, output_size)),
        "dec_w_hh": u(ks[5], (hidden_size, hidden_size)),
        "dec_b_ih": u(ks[6], (hidden_size,)),
        "dec_b_hh": u(ks[7], (hidden_size,)),
        "fc_w": u(ks[8], (output_size, hidden_size)),
        "fc_b": u(ks[9], (output_size,)),
    }


def seq2seq_reference(enc_input, enc_hidden, dec_input, params, *, matmul_bf16=False):
    """Pure-JAX reference mirroring torch semantics.  With matmul_bf16=True the
    matmul inputs are cast to bf16 (f32 accumulation) to precision-match the
    kernel for a tight structural check."""
    if matmul_bf16:
        def dot(a, b):
            return jnp.dot(a.astype(jnp.bfloat16), b.astype(jnp.bfloat16),
                           preferred_element_type=jnp.float32)
    else:
        def dot(a, b):
            return jnp.dot(a, b, preferred_element_type=jnp.float32)

    enc_x = jnp.transpose(enc_input, (1, 0, 2))
    dec_x = jnp.transpose(dec_input, (1, 0, 2))
    h = enc_hidden[0]

    def enc_step(h, x):
        h = jnp.tanh(dot(x, params["enc_w_ih"].T) + params["enc_b_ih"]
                     + dot(h, params["enc_w_hh"].T) + params["enc_b_hh"])
        return h, None

    h, _ = lax.scan(enc_step, h, enc_x)

    def dec_step(h, x):
        h = jnp.tanh(dot(x, params["dec_w_ih"].T) + params["dec_b_ih"]
                     + dot(h, params["dec_w_hh"].T) + params["dec_b_hh"])
        return h, h

    _, outs = lax.scan(dec_step, h, dec_x)            # (S_dec, B, H)
    return dot(outs, params["fc_w"].T) + params["fc_b"]   # (S_dec, B, O)


if __name__ == "__main__":
    batch = 2
    seq_enc = 8
    seq_dec = 8
    input_size = 16
    hidden_size = 32
    output_size = 16

    key = jax.random.PRNGKey(0)
    k_enc, k_dec, k_h, k_p = jax.random.split(key, 4)

    enc_input = jax.random.normal(k_enc, (batch, seq_enc, input_size), jnp.float32)
    dec_input = jax.random.normal(k_dec, (batch, seq_dec, output_size), jnp.float32)
    enc_hidden = jax.random.normal(k_h, (1, batch, hidden_size), jnp.float32)
    params = init_params(k_p, input_size, hidden_size, output_size)

    fwd = jax.jit(seq2seq_forward)
    out = jax.block_until_ready(fwd(enc_input, enc_hidden, dec_input, params))
    assert out.shape == (seq_dec, batch, output_size), out.shape

    # Tight structural check vs a precision-matched (bf16 matmul, f32 accum) reference.
    ref_bf16 = seq2seq_reference(enc_input, enc_hidden, dec_input, params, matmul_bf16=True)
    err_bf16 = float(jnp.max(jnp.abs(out - ref_bf16)))
    assert jnp.allclose(out, ref_bf16, atol=1e-3, rtol=1e-3), err_bf16

    # Loose check vs the full-f32 torch-semantics reference: the bf16 recurrence
    # drifts over 16 chained tanh steps, so 1e-4 is too tight for this comparison.
    ref_f32 = seq2seq_reference(enc_input, enc_hidden, dec_input, params, matmul_bf16=False)
    err_f32 = float(jnp.max(jnp.abs(out - ref_f32)))
    assert jnp.allclose(out, ref_f32, atol=5e-2, rtol=5e-2), err_f32

    print("KERNEL_OK")
</pallas_src>

<mosaic_0001>
module attributes {stable_mosaic.version = 11 : i64} {
  func.func @_seq2seq_kernel(%arg0: memref<128x128xbf16, #tpu.memory_space<vmem>>, %arg1: memref<128x128xbf16, #tpu.memory_space<vmem>>, %arg2: memref<16x128xf32, #tpu.memory_space<vmem>>, %arg3: memref<128x128xbf16, #tpu.memory_space<vmem>>, %arg4: memref<128x128xbf16, #tpu.memory_space<vmem>>, %arg5: memref<1x128xf32, #tpu.memory_space<vmem>>, %arg6: memref<128x128xbf16, #tpu.memory_space<vmem>>, %arg7: memref<128x128xbf16, #tpu.memory_space<vmem>>, %arg8: memref<1x128xf32, #tpu.memory_space<vmem>>, %arg9: memref<128x128xbf16, #tpu.memory_space<vmem>>, %arg10: memref<1x128xf32, #tpu.memory_space<vmem>>, %arg11: memref<128x128xf32, #tpu.memory_space<vmem>>) attributes {dimension_semantics = [], scalar_prefetch = 0 : i64, scratch_operands = 0 : i64, tpu.core_type = #tpu.core_type<tc>} {
    %c0 = arith.constant 0 : index
    %c0_0 = arith.constant 0 : index
    %0 = vector.load %arg4[%c0, %c0_0] : memref<128x128xbf16, #tpu.memory_space<vmem>>, vector<128x128xbf16>
    %c0_1 = arith.constant 0 : index
    %c0_2 = arith.constant 0 : index
    %1 = vector.load %arg7[%c0_1, %c0_2] : memref<128x128xbf16, #tpu.memory_space<vmem>>, vector<128x128xbf16>
    %c0_3 = arith.constant 0 : index
    %c0_4 = arith.constant 0 : index
    %2 = vector.load %arg9[%c0_3, %c0_4] : memref<128x128xbf16, #tpu.memory_space<vmem>>, vector<128x128xbf16>
    %c0_5 = arith.constant 0 : index
    %c0_6 = arith.constant 0 : index
    %3 = vector.load %arg10[%c0_5, %c0_6] : memref<1x128xf32, #tpu.memory_space<vmem>>, vector<1x128xf32>
    %c0_7 = arith.constant 0 : index
    %c0_8 = arith.constant 0 : index
    %4 = vector.load %arg0[%c0_7, %c0_8] : memref<128x128xbf16, #tpu.memory_space<vmem>>, vector<128x128xbf16>
    %c0_9 = arith.constant 0 : index
    %c0_10 = arith.constant 0 : index
    %5 = vector.load %arg3[%c0_9, %c0_10] : memref<128x128xbf16, #tpu.memory_space<vmem>>, vector<128x128xbf16>
    %cst = arith.constant dense<0.000000e+00> : vector<128x128xf32>
    %6 = tpu.matmul %4, %5, %cst {dimension_numbers = #tpu.dot_dimension_numbers<[1], [0], [0], [1], [0, 0, 1, 1], [], []>} : vector<128x128xbf16>, vector<128x128xbf16>, vector<128x128xf32> -> vector<128x128xf32>
    %c0_11 = arith.constant 0 : index
    %c0_12 = arith.constant 0 : index
    %7 = vector.load %arg5[%c0_11, %c0_12] : memref<1x128xf32, #tpu.memory_space<vmem>>, vector<1x128xf32>
    %8 = vector.broadcast %7 : vector<1x128xf32> to vector<128x128xf32>
    %9 = arith.addf %6, %8 : vector<128x128xf32>
    %c0_13 = arith.constant 0 : index
    %c0_14 = arith.constant 0 : index
    %10 = vector.load %arg1[%c0_13, %c0_14] : memref<128x128xbf16, #tpu.memory_space<vmem>>, vector<128x128xbf16>
    %c0_15 = arith.constant 0 : index
    %c0_16 = arith.constant 0 : index
    %11 = vector.load %arg6[%c0_15, %c0_16] : memref<128x128xbf16, #tpu.memory_space<vmem>>, vector<128x128xbf16>
    %cst_17 = arith.constant dense<0.000000e+00> : vector<128x128xf32>
    %12 = tpu.matmul %10, %11, %cst_17 {dimension_numbers = #tpu.dot_dimension_numbers<[1], [0], [0], [1], [0, 0, 1, 1], [], []>} : vector<128x128xbf16>, vector<128x128xbf16>, vector<128x128xf32> -> vector<128x128xf32>
    %c0_18 = arith.constant 0 : index
    %c0_19 = arith.constant 0 : index
    %13 = vector.load %arg8[%c0_18, %c0_19] : memref<1x128xf32, #tpu.memory_space<vmem>>, vector<1x128xf32>
    %14 = vector.broadcast %13 : vector<1x128xf32> to vector<128x128xf32>
    %15 = arith.addf %12, %14 : vector<128x128xf32>
    %c0_20 = arith.constant 0 : index
    %c0_21 = arith.constant 0 : index
    %16 = vector.load %arg2[%c0_20, %c0_21] : memref<16x128xf32, #tpu.memory_space<vmem>>, vector<16x128xf32>
    %17 = arith.truncf %16 : vector<16x128xf32> to vector<16x128xbf16>
    %18 = vector.extract_strided_slice %9 {offsets = [0, 0], sizes = [16, 128], strides = [1, 1]} : vector<128x128xf32> to vector<16x128xf32>
    %cst_22 = arith.constant dense<0.000000e+00> : vector<16x128xf32>
    %19 = tpu.matmul %17, %0, %cst_22 {dimension_numbers = #tpu.dot_dimension_numbers<[1], [0], [0], [1], [0, 0, 1, 1], [], []>} : vector<16x128xbf16>, vector<128x128xbf16>, vector<16x128xf32> -> vector<16x128xf32>
    %20 = arith.addf %18, %19 : vector<16x128xf32>
    %21 = math.tanh %20 : vector<16x128xf32>
    %22 = arith.truncf %21 : vector<16x128xf32> to vector<16x128xbf16>
    %23 = vector.extract_strided_slice %9 {offsets = [16, 0], sizes = [16, 128], strides = [1, 1]} : vector<128x128xf32> to vector<16x128xf32>
    %cst_23 = arith.constant dense<0.000000e+00> : vector<16x128xf32>
    %24 = tpu.matmul %22, %0, %cst_23 {dimension_numbers = #tpu.dot_dimension_numbers<[1], [0], [0], [1], [0, 0, 1, 1], [], []>} : vector<16x128xbf16>, vector<128x128xbf16>, vector<16x128xf32> -> vector<16x128xf32>
    %25 = arith.addf %23, %24 : vector<16x128xf32>
    %26 = math.tanh %25 : vector<16x128xf32>
    %27 = arith.truncf %26 : vector<16x128xf32> to vector<16x128xbf16>
    %28 = vector.extract_strided_slice %9 {offsets = [32, 0], sizes = [16, 128], strides = [1, 1]} : vector<128x128xf32> to vector<16x128xf32>
    %cst_24 = arith.constant dense<0.000000e+00> : vector<16x128xf32>
    %29 = tpu.matmul %27, %0, %cst_24 {dimension_numbers = #tpu.dot_dimension_numbers<[1], [0], [0], [1], [0, 0, 1, 1], [], []>} : vector<16x128xbf16>, vector<128x128xbf16>, vector<16x128xf32> -> vector<16x128xf32>
    %30 = arith.addf %28, %29 : vector<16x128xf32>
    %31 = math.tanh %30 : vector<16x128xf32>
    %32 = arith.truncf %31 : vector<16x128xf32> to vector<16x128xbf16>
    %33 = vector.extract_strided_slice %9 {offsets = [48, 0], sizes = [16, 128], strides = [1, 1]} : vector<128x128xf32> to vector<16x128xf32>
    %cst_25 = arith.constant dense<0.000000e+00> : vector<16x128xf32>
    %34 = tpu.matmul %32, %0, %cst_25 {dimension_numbers = #tpu.dot_dimension_numbers<[1], [0], [0], [1], [0, 0, 1, 1], [], []>} : vector<16x128xbf16>, vector<128x128xbf16>, vector<16x128xf32> -> vector<16x128xf32>
    %35 = arith.addf %33, %34 : vector<16x128xf32>
    %36 = math.tanh %35 : vector<16x128xf32>
    %37 = arith.truncf %36 : vector<16x128xf32> to vector<16x128xbf16>
    %38 = vector.extract_strided_slice %9 {offsets = [64, 0], sizes = [16, 128], strides = [1, 1]} : vector<128x128xf32> to vector<16x128xf32>
    %cst_26 = arith.constant dense<0.000000e+00> : vector<16x128xf32>
    %39 = tpu.matmul %37, %0, %cst_26 {dimension_numbers = #tpu.dot_dimension_numbers<[1], [0], [0], [1], [0, 0, 1, 1], [], []>} : vector<16x128xbf16>, vector<128x128xbf16>, vector<16x128xf32> -> vector<16x128xf32>
    %40 = arith.addf %38, %39 : vector<16x128xf32>
    %41 = math.tanh %40 : vector<16x128xf32>
    %42 = arith.truncf %41 : vector<16x128xf32> to vector<16x128xbf16>
    %43 = vector.extract_strided_slice %9 {offsets = [80, 0], sizes = [16, 128], strides = [1, 1]} : vector<128x128xf32> to vector<16x128xf32>
    %cst_27 = arith.constant dense<0.000000e+00> : vector<16x128xf32>
    %44 = tpu.matmul %42, %0, %cst_27 {dimension_numbers = #tpu.dot_dimension_numbers<[1], [0], [0], [1], [0, 0, 1, 1], [], []>} : vector<16x128xbf16>, vector<128x128xbf16>, vector<16x128xf32> -> vector<16x128xf32>
    %45 = arith.addf %43, %44 : vector<16x128xf32>
    %46 = math.tanh %45 : vector<16x128xf32>
    %47 = arith.truncf %46 : vector<16x128xf32> to vector<16x128xbf16>
    %48 = vector.extract_strided_slice %9 {offsets = [96, 0], sizes = [16, 128], strides = [1, 1]} : vector<128x128xf32> to vector<16x128xf32>
    %cst_28 = arith.constant dense<0.000000e+00> : vector<16x128xf32>
    %49 = tpu.matmul %47, %0, %cst_28 {dimension_numbers = #tpu.dot_dimension_numbers<[1], [0], [0], [1], [0, 0, 1, 1], [], []>} : vector<16x128xbf16>, vector<128x128xbf16>, vector<16x128xf32> -> vector<16x128xf32>
    %50 = arith.addf %48, %49 : vector<16x128xf32>
    %51 = math.tanh %50 : vector<16x128xf32>
    %52 = arith.truncf %51 : vector<16x128xf32> to vector<16x128xbf16>
    %53 = vector.extract_strided_slice %9 {offsets = [112, 0], sizes = [16, 128], strides = [1, 1]} : vector<128x128xf32> to vector<16x128xf32>
    %cst_29 = arith.constant dense<0.000000e+00> : vector<16x128xf32>
    %54 = tpu.matmul %52, %0, %cst_29 {dimension_numbers = #tpu.dot_dimension_numbers<[1], [0], [0], [1], [0, 0, 1, 1], [], []>} : vector<16x128xbf16>, vector<128x128xbf16>, vector<16x128xf32> -> vector<16x128xf32>
    %55 = arith.addf %53, %54 : vector<16x128xf32>
    %56 = math.tanh %55 : vector<16x128xf32>
    %57 = arith.truncf %56 : vector<16x128xf32> to vector<16x128xbf16>
    %58 = vector.extract_strided_slice %15 {offsets = [0, 0], sizes = [16, 128], strides = [1, 1]} : vector<128x128xf32> to vector<16x128xf32>
    %cst_30 = arith.constant dense<0.000000e+00> : vector<16x128xf32>
    %59 = tpu.matmul %57, %1, %cst_30 {dimension_numbers = #tpu.dot_dimension_numbers<[1], [0], [0], [1], [0, 0, 1, 1], [], []>} : vector<16x128xbf16>, vector<128x128xbf16>, vector<16x128xf32> -> vector<16x128xf32>
    %60 = arith.addf %58, %59 : vector<16x128xf32>
    %61 = math.tanh %60 : vector<16x128xf32>
    %62 = arith.truncf %61 : vector<16x128xf32> to vector<16x128xbf16>
    %cst_31 = arith.constant dense<0.000000e+00> : vector<16x128xf32>
    %63 = tpu.matmul %62, %2, %cst_31 {dimension_numbers = #tpu.dot_dimension_numbers<[1], [0], [0], [1], [0, 0, 1, 1], [], []>} : vector<16x128xbf16>, vector<128x128xbf16>, vector<16x128xf32> -> vector<16x128xf32>
    %64 = vector.broadcast %3 : vector<1x128xf32> to vector<16x128xf32>
    %65 = arith.addf %63, %64 : vector<16x128xf32>
    %c0_32 = arith.constant 0 : index
    %c0_33 = arith.constant 0 : index
    %66 = vector.load %arg11[%c0_32, %c0_33] : memref<128x128xf32, #tpu.memory_space<vmem>>, vector<16x128xf32>
    tpu.vector_store %arg11[%c0_32, %c0_33], %65 {strides = array<i32>} : memref<128x128xf32, #tpu.memory_space<vmem>>, vector<16x128xf32>,
    %67 = vector.extract_strided_slice %15 {offsets = [16, 0], sizes = [16, 128], strides = [1, 1]} : vector<128x128xf32> to vector<16x128xf32>
    %cst_34 = arith.constant dense<0.000000e+00> : vector<16x128xf32>
    %68 = tpu.matmul %62, %1, %cst_34 {dimension_numbers = #tpu.dot_dimension_numbers<[1], [0], [0], [1], [0, 0, 1, 1], [], []>} : vector<16x128xbf16>, vector<128x128xbf16>, vector<16x128xf32> -> vector<16x128xf32>
    %69 = arith.addf %67, %68 : vector<16x128xf32>
    %70 = math.tanh %69 : vector<16x128xf32>
    %71 = arith.truncf %70 : vector<16x128xf32> to vector<16x128xbf16>
    %cst_35 = arith.constant dense<0.000000e+00> : vector<16x128xf32>
    %72 = tpu.matmul %71, %2, %cst_35 {dimension_numbers = #tpu.dot_dimension_numbers<[1], [0], [0], [1], [0, 0, 1, 1], [], []>} : vector<16x128xbf16>, vector<128x128xbf16>, vector<16x128xf32> -> vector<16x128xf32>
    %73 = vector.broadcast %3 : vector<1x128xf32> to vector<16x128xf32>
    %74 = arith.addf %72, %73 : vector<16x128xf32>
    %c16 = arith.constant 16 : index
    %c0_36 = arith.constant 0 : index
    %75 = vector.load %arg11[%c16, %c0_36] : memref<128x128xf32, #tpu.memory_space<vmem>>, vector<16x128xf32>
    tpu.vector_store %arg11[%c16, %c0_36], %74 {strides = array<i32>} : memref<128x128xf32, #tpu.memory_space<vmem>>, vector<16x128xf32>,
    %76 = vector.extract_strided_slice %15 {offsets = [32, 0], sizes = [16, 128], strides = [1, 1]} : vector<128x128xf32> to vector<16x128xf32>
    %cst_37 = arith.constant dense<0.000000e+00> : vector<16x128xf32>
    %77 = tpu.matmul %71, %1, %cst_37 {dimension_numbers = #tpu.dot_dimension_numbers<[1], [0], [0], [1], [0, 0, 1, 1], [], []>} : vector<16x128xbf16>, vector<128x128xbf16>, vector<16x128xf32> -> vector<16x128xf32>
    %78 = arith.addf %76, %77 : vector<16x128xf32>
    %79 = math.tanh %78 : vector<16x128xf32>
    %80 = arith.truncf %79 : vector<16x128xf32> to vector<16x128xbf16>
    %cst_38 = arith.constant dense<0.000000e+00> : vector<16x128xf32>
    %81 = tpu.matmul %80, %2, %cst_38 {dimension_numbers = #tpu.dot_dimension_numbers<[1], [0], [0], [1], [0, 0, 1, 1], [], []>} : vector<16x128xbf16>, vector<128x128xbf16>, vector<16x128xf32> -> vector<16x128xf32>
    %82 = vector.broadcast %3 : vector<1x128xf32> to vector<16x128xf32>
    %83 = arith.addf %81, %82 : vector<16x128xf32>
    %c32 = arith.constant 32 : index
    %c0_39 = arith.constant 0 : index
    %84 = vector.load %arg11[%c32, %c0_39] : memref<128x128xf32, #tpu.memory_space<vmem>>, vector<16x128xf32>
    tpu.vector_store %arg11[%c32, %c0_39], %83 {strides = array<i32>} : memref<128x128xf32, #tpu.memory_space<vmem>>, vector<16x128xf32>,
    %85 = vector.extract_strided_slice %15 {offsets = [48, 0], sizes = [16, 128], strides = [1, 1]} : vector<128x128xf32> to vector<16x128xf32>
    %cst_40 = arith.constant dense<0.000000e+00> : vector<16x128xf32>
    %86 = tpu.matmul %80, %1, %cst_40 {dimension_numbers = #tpu.dot_dimension_numbers<[1], [0], [0], [1], [0, 0, 1, 1], [], []>} : vector<16x128xbf16>, vector<128x128xbf16>, vector<16x128xf32> -> vector<16x128xf32>
    %87 = arith.addf %85, %86 : vector<16x128xf32>
    %88 = math.tanh %87 : vector<16x128xf32>
    %89 = arith.truncf %88 : vector<16x128xf32> to vector<16x128xbf16>
    %cst_41 = arith.constant dense<0.000000e+00> : vector<16x128xf32>
    %90 = tpu.matmul %89, %2, %cst_41 {dimension_numbers = #tpu.dot_dimension_numbers<[1], [0], [0], [1], [0, 0, 1, 1], [], []>} : vector<16x128xbf16>, vector<128x128xbf16>, vector<16x128xf32> -> vector<16x128xf32>
    %91 = vector.broadcast %3 : vector<1x128xf32> to vector<16x128xf32>
    %92 = arith.addf %90, %91 : vector<16x128xf32>
    %c48 = arith.constant 48 : index
    %c0_42 = arith.constant 0 : index
    %93 = vector.load %arg11[%c48, %c0_42] : memref<128x128xf32, #tpu.memory_space<vmem>>, vector<16x128xf32>
    tpu.vector_store %arg11[%c48, %c0_42], %92 {strides = array<i32>} : memref<128x128xf32, #tpu.memory_space<vmem>>, vector<16x128xf32>,
    %94 = vector.extract_strided_slice %15 {offsets = [64, 0], sizes = [16, 128], strides = [1, 1]} : vector<128x128xf32> to vector<16x128xf32>
    %cst_43 = arith.constant dense<0.000000e+00> : vector<16x128xf32>
    %95 = tpu.matmul %89, %1, %cst_43 {dimension_numbers = #tpu.dot_dimension_numbers<[1], [0], [0], [1], [0, 0, 1, 1], [], []>} : vector<16x128xbf16>, vector<128x128xbf16>, vector<16x128xf32> -> vector<16x128xf32>
    %96 = arith.addf %94, %95 : vector<16x128xf32>
    %97 = math.tanh %96 : vector<16x128xf32>
    %98 = arith.truncf %97 : vector<16x128xf32> to vector<16x128xbf16>
    %cst_44 = arith.constant dense<0.000000e+00> : vector<16x128xf32>
    %99 = tpu.matmul %98, %2, %cst_44 {dimension_numbers = #tpu.dot_dimension_numbers<[1], [0], [0], [1], [0, 0, 1, 1], [], []>} : vector<16x128xbf16>, vector<128x128xbf16>, vector<16x128xf32> -> vector<16x128xf32>
    %100 = vector.broadcast %3 : vector<1x128xf32> to vector<16x128xf32>
    %101 = arith.addf %99, %100 : vector<16x128xf32>
    %c64 = arith.constant 64 : index
    %c0_45 = arith.constant 0 : index
    %102 = vector.load %arg11[%c64, %c0_45] : memref<128x128xf32, #tpu.memory_space<vmem>>, vector<16x128xf32>
    tpu.vector_store %arg11[%c64, %c0_45], %101 {strides = array<i32>} : memref<128x128xf32, #tpu.memory_space<vmem>>, vector<16x128xf32>,
    %103 = vector.extract_strided_slice %15 {offsets = [80, 0], sizes = [16, 128], strides = [1, 1]} : vector<128x128xf32> to vector<16x128xf32>
    %cst_46 = arith.constant dense<0.000000e+00> : vector<16x128xf32>
    %104 = tpu.matmul %98, %1, %cst_46 {dimension_numbers = #tpu.dot_dimension_numbers<[1], [0], [0], [1], [0, 0, 1, 1], [], []>} : vector<16x128xbf16>, vector<128x128xbf16>, vector<16x128xf32> -> vector<16x128xf32>
    %105 = arith.addf %103, %104 : vector<16x128xf32>
    %106 = math.tanh %105 : vector<16x128xf32>
    %107 = arith.truncf %106 : vector<16x128xf32> to vector<16x128xbf16>
    %cst_47 = arith.constant dense<0.000000e+00> : vector<16x128xf32>
    %108 = tpu.matmul %107, %2, %cst_47 {dimension_numbers = #tpu.dot_dimension_numbers<[1], [0], [0], [1], [0, 0, 1, 1], [], []>} : vector<16x128xbf16>, vector<128x128xbf16>, vector<16x128xf32> -> vector<16x128xf32>
    %109 = vector.broadcast %3 : vector<1x128xf32> to vector<16x128xf32>
    %110 = arith.addf %108, %109 : vector<16x128xf32>
    %c80 = arith.constant 80 : index
    %c0_48 = arith.constant 0 : index
    %111 = vector.load %arg11[%c80, %c0_48] : memref<128x128xf32, #tpu.memory_space<vmem>>, vector<16x128xf32>
    tpu.vector_store %arg11[%c80, %c0_48], %110 {strides = array<i32>} : memref<128x128xf32, #tpu.memory_space<vmem>>, vector<16x128xf32>,
    %112 = vector.extract_strided_slice %15 {offsets = [96, 0], sizes = [16, 128], strides = [1, 1]} : vector<128x128xf32> to vector<16x128xf32>
    %cst_49 = arith.constant dense<0.000000e+00> : vector<16x128xf32>
    %113 = tpu.matmul %107, %1, %cst_49 {dimension_numbers = #tpu.dot_dimension_numbers<[1], [0], [0], [1], [0, 0, 1, 1], [], []>} : vector<16x128xbf16>, vector<128x128xbf16>, vector<16x128xf32> -> vector<16x128xf32>
    %114 = arith.addf %112, %113 : vector<16x128xf32>
    %115 = math.tanh %114 : vector<16x128xf32>
    %116 = arith.truncf %115 : vector<16x128xf32> to vector<16x128xbf16>
    %cst_50 = arith.constant dense<0.000000e+00> : vector<16x128xf32>
    %117 = tpu.matmul %116, %2, %cst_50 {dimension_numbers = #tpu.dot_dimension_numbers<[1], [0], [0], [1], [0, 0, 1, 1], [], []>} : vector<16x128xbf16>, vector<128x128xbf16>, vector<16x128xf32> -> vector<16x128xf32>
    %118 = vector.broadcast %3 : vector<1x128xf32> to vector<16x128xf32>
    %119 = arith.addf %117, %118 : vector<16x128xf32>
    %c96 = arith.constant 96 : index
    %c0_51 = arith.constant 0 : index
    %120 = vector.load %arg11[%c96, %c0_51] : memref<128x128xf32, #tpu.memory_space<vmem>>, vector<16x128xf32>
    tpu.vector_store %arg11[%c96, %c0_51], %119 {strides = array<i32>} : memref<128x128xf32, #tpu.memory_space<vmem>>, vector<16x128xf32>,
    %121 = vector.extract_strided_slice %15 {offsets = [112, 0], sizes = [16, 128], strides = [1, 1]} : vector<128x128xf32> to vector<16x128xf32>
    %cst_52 = arith.constant dense<0.000000e+00> : vector<16x128xf32>
    %122 = tpu.matmul %116, %1, %cst_52 {dimension_numbers = #tpu.dot_dimension_numbers<[1], [0], [0], [1], [0, 0, 1, 1], [], []>} : vector<16x128xbf16>, vector<128x128xbf16>, vector<16x128xf32> -> vector<16x128xf32>
    %123 = arith.addf %121, %122 : vector<16x128xf32>
    %124 = math.tanh %123 : vector<16x128xf32>
    %125 = arith.truncf %124 : vector<16x128xf32> to vector<16x128xbf16>
    %cst_53 = arith.constant dense<0.000000e+00> : vector<16x128xf32>
    %126 = tpu.matmul %125, %2, %cst_53 {dimension_numbers = #tpu.dot_dimension_numbers<[1], [0], [0], [1], [0, 0, 1, 1], [], []>} : vector<16x128xbf16>, vector<128x128xbf16>, vector<16x128xf32> -> vector<16x128xf32>
    %127 = vector.broadcast %3 : vector<1x128xf32> to vector<16x128xf32>
    %128 = arith.addf %126, %127 : vector<16x128xf32>
    %c112 = arith.constant 112 : index
    %c0_54 = arith.constant 0 : index
    %129 = vector.load %arg11[%c112, %c0_54] : memref<128x128xf32, #tpu.memory_space<vmem>>, vector<16x128xf32>
    tpu.vector_store %arg11[%c112, %c0_54], %128 {strides = array<i32>} : memref<128x128xf32, #tpu.memory_space<vmem>>, vector<16x128xf32>,
    return
  }
}

</mosaic_0001>

<llo_original>
// kernel: seq2seq_forward.1
$region0: #{seq2seq_forward.1}
  #allocation0 [shape = 'u32[]', space=smem, size = 0x4, offset = 0x4, fixed_abs, tag = 'smem constant byte address 0x4 - core index']
  #allocation1 [shape = 'u32[144,128]{1,0:T(1,128)}', space=vmem, size = 0x12000, scoped, tag = 'internal scratch']
  %s0 = inlined_call_operand.vmem [shape: bf16[128,128], index: 0, kind: input, shape index: {}]
  %s1 = inlined_call_operand.vmem [shape: bf16[128,128], index: 1, kind: input, shape index: {}]
  %s2 = inlined_call_operand.vmem [shape: f32[16,128], index: 2, kind: input, shape index: {}]
  %s3 = inlined_call_operand.vmem [shape: bf16[128,128], index: 3, kind: input, shape index: {}]
  %s4 = inlined_call_operand.vmem [shape: bf16[128,128], index: 4, kind: input, shape index: {}]
  %s5 = inlined_call_operand.vmem [shape: f32[1,128], index: 5, kind: input, shape index: {}]
  %s6 = inlined_call_operand.vmem [shape: bf16[128,128], index: 6, kind: input, shape index: {}]
  %s7 = inlined_call_operand.vmem [shape: bf16[128,128], index: 7, kind: input, shape index: {}]
  %s8 = inlined_call_operand.vmem [shape: f32[1,128], index: 8, kind: input, shape index: {}]
  %s9 = inlined_call_operand.vmem [shape: bf16[128,128], index: 9, kind: input, shape index: {}]
  %s10 = inlined_call_operand.vmem [shape: f32[1,128], index: 10, kind: input, shape index: {}]
  %s11 = inlined_call_operand.vmem [shape: f32[128,128], index: 11, kind: output, shape index: {}]
  %s12 = sld [smem:[#allocation0]]
  $region54: #{seq2seq_forward.1} parent=0
    _
  %s14 = ssub.s32 1, %s12
  %s15 = scalar_select 0, %s14, %s12
  // Predicated region
  $region2: #{seq2seq_forward.1} parent=0 // pred_check
    _
  $region3: #{seq2seq_forward.1} parent=0 // pred_check_branch
    %17 = sbr.rel (0) target = $region5
  $region4: #{seq2seq_forward.1} parent=0 // pred_region
    _
  $region5: #{seq2seq_forward.1} parent=0 // pred_fallthru
    _
  // Predicated region
  $region6: #{seq2seq_forward.1} parent=0 // pred_check
    _
  $region7: #{seq2seq_forward.1} parent=0 // pred_check_branch
    %19 = sbr.rel (0) target = $region9
  $region8: #{seq2seq_forward.1} parent=0 // pred_region
    _
  $region9: #{seq2seq_forward.1} parent=0 // pred_fallthru
    _
  // Predicated region
  $region10: #{seq2seq_forward.1} parent=0 // pred_check
    _
  $region11: #{seq2seq_forward.1} parent=0 // pred_check_branch
    %21 = sbr.rel (0) target = $region13
  $region12: #{seq2seq_forward.1} parent=0 // pred_region
    _
  $region13: #{seq2seq_forward.1} parent=0 // pred_fallthru
    _
  // Predicated region
  $region14: #{seq2seq_forward.1} parent=0 // pred_check
    _
  $region15: #{seq2seq_forward.1} parent=0 // pred_check_branch
    %23 = sbr.rel (0) target = $region17
  $region16: #{seq2seq_forward.1} parent=0 // pred_region
    _
  $region17: #{seq2seq_forward.1} parent=0 // pred_fallthru
    _
  // Predicated region
  $region18: #{seq2seq_forward.1} parent=0 // pred_check
    _
  $region19: #{seq2seq_forward.1} parent=0 // pred_check_branch
    %25 = sbr.rel (0) target = $region21
  $region20: #{seq2seq_forward.1} parent=0 // pred_region
    _
  $region21: #{seq2seq_forward.1} parent=0 // pred_fallthru
    _
  // Predicated region
  $region22: #{seq2seq_forward.1} parent=0 // pred_check
    _
  $region23: #{seq2seq_forward.1} parent=0 // pred_check_branch
    %27 = sbr.rel (0) target = $region25
  $region24: #{seq2seq_forward.1} parent=0 // pred_region
    _
  $region25: #{seq2seq_forward.1} parent=0 // pred_fallthru
    _
  // Predicated region
  $region26: #{seq2seq_forward.1} parent=0 // pred_check
    _
  $region27: #{seq2seq_forward.1} parent=0 // pred_check_branch
    %29 = sbr.rel (0) target = $region29
  $region28: #{seq2seq_forward.1} parent=0 // pred_region
    _
  $region29: #{seq2seq_forward.1} parent=0 // pred_fallthru
    _
  // Predicated region
  $region30: #{seq2seq_forward.1} parent=0 // pred_check
    _
  $region31: #{seq2seq_forward.1} parent=0 // pred_check_branch
    %31 = sbr.rel (0) target = $region33
  $region32: #{seq2seq_forward.1} parent=0 // pred_region
    _
  $region33: #{seq2seq_forward.1} parent=0 // pred_fallthru
    _
  // Predicated region
  $region34: #{seq2seq_forward.1} parent=0 // pred_check
    _
  $region35: #{seq2seq_forward.1} parent=0 // pred_check_branch
    %33 = sbr.rel (0) target = $region37
  $region36: #{seq2seq_forward.1} parent=0 // pred_region
    _
  $region37: #{seq2seq_forward.1} parent=0 // pred_fallthru
    _
  // Predicated region
  $region38: #{seq2seq_forward.1} parent=0 // pred_check
    _
  $region39: #{seq2seq_forward.1} parent=0 // pred_check_branch
    %35 = sbr.rel (0) target = $region41
  $region40: #{seq2seq_forward.1} parent=0 // pred_region
    _
  $region41: #{seq2seq_forward.1} parent=0 // pred_fallthru
    _
  // Predicated region
  $region42: #{seq2seq_forward.1} parent=0 // pred_check
    _
  $region43: #{seq2seq_forward.1} parent=0 // pred_check_branch
    %37 = sbr.rel (0) target = $region45
  $region44: #{seq2seq_forward.1} parent=0 // pred_region
    _
  $region45: #{seq2seq_forward.1} parent=0 // pred_fallthru
    _
  %v39 = vld [vmem:[%s4] sm:$0xf]
  %v40 = vld [vmem:[%s4 + $0x4] sm:$0xf]
  %v41 = vld [vmem:[%s4 + $0x8] sm:$0xf]
  %v42 = vld [vmem:[%s4 + $0xc] sm:$0xf]
  %v43 = vld [vmem:[%s4 + $0x10] sm:$0xf]
  %v44 = vld [vmem:[%s4 + $0x14] sm:$0xf]
  %v45 = vld [vmem:[%s4 + $0x18] sm:$0xf]
  %v46 = vld [vmem:[%s4 + $0x1c] sm:$0xf]
  %v47 = vld [vmem:[%s4 + $0x20] sm:$0xf]
  %v48 = vld [vmem:[%s4 + $0x24] sm:$0xf]
  %v49 = vld [vmem:[%s4 + $0x28] sm:$0xf]
  %v50 = vld [vmem:[%s4 + $0x2c] sm:$0xf]
  %v51 = vld [vmem:[%s4 + $0x30] sm:$0xf]
  %v52 = vld [vmem:[%s4 + $0x34] sm:$0xf]
  %v53 = vld [vmem:[%s4 + $0x38] sm:$0xf]
  %v54 = vld [vmem:[%s4 + $0x3c] sm:$0xf]
  %v55 = vld [vmem:[%s7] sm:$0xf]
  %v56 = vld [vmem:[%s7 + $0x4] sm:$0xf]
  %v57 = vld [vmem:[%s7 + $0x8] sm:$0xf]
  %v58 = vld [vmem:[%s7 + $0xc] sm:$0xf]
  %v59 = vld [vmem:[%s7 + $0x10] sm:$0xf]
  %v60 = vld [vmem:[%s7 + $0x14] sm:$0xf]
  %v61 = vld [vmem:[%s7 + $0x18] sm:$0xf]
  %v62 = vld [vmem:[%s7 + $0x1c] sm:$0xf]
  %v63 = vld [vmem:[%s7 + $0x20] sm:$0xf]
  %v64 = vld [vmem:[%s7 + $0x24] sm:$0xf]
  %v65 = vld [vmem:[%s7 + $0x28] sm:$0xf]
  %v66 = vld [vmem:[%s7 + $0x2c] sm:$0xf]
  %v67 = vld [vmem:[%s7 + $0x30] sm:$0xf]
  %v68 = vld [vmem:[%s7 + $0x34] sm:$0xf]
  %v69 = vld [vmem:[%s7 + $0x38] sm:$0xf]
  %v70 = vld [vmem:[%s7 + $0x3c] sm:$0xf]
  %v71 = vld [vmem:[%s9] sm:$0xf]
  %v72 = vld [vmem:[%s9 + $0x4] sm:$0xf]
  %v73 = vld [vmem:[%s9 + $0x8] sm:$0xf]
  %v74 = vld [vmem:[%s9 + $0xc] sm:$0xf]
  %v75 = vld [vmem:[%s9 + $0x10] sm:$0xf]
  %v76 = vld [vmem:[%s9 + $0x14] sm:$0xf]
  %v77 = vld [vmem:[%s9 + $0x18] sm:$0xf]
  %v78 = vld [vmem:[%s9 + $0x1c] sm:$0xf]
  %v79 = vld [vmem:[%s9 + $0x20] sm:$0xf]
  %v80 = vld [vmem:[%s9 + $0x24] sm:$0xf]
  %v81 = vld [vmem:[%s9 + $0x28] sm:$0xf]
  %v82 = vld [vmem:[%s9 + $0x2c] sm:$0xf]
  %v83 = vld [vmem:[%s9 + $0x30] sm:$0xf]
  %v84 = vld [vmem:[%s9 + $0x34] sm:$0xf]
  %v85 = vld [vmem:[%s9 + $0x38] sm:$0xf]
  %v86 = vld [vmem:[%s9 + $0x3c] sm:$0xf]
  %v87 = vld [vmem:[%s10] sm:$0x1]
  %v88 = vld [vmem:[%s0] sm:$0xf]
  %v89 = vld [vmem:[%s0 + $0x4] sm:$0xf]
  %v90 = vld [vmem:[%s0 + $0x8] sm:$0xf]
  %v91 = vld [vmem:[%s0 + $0xc] sm:$0xf]
  %v92 = vld [vmem:[%s0 + $0x10] sm:$0xf]
  %v93 = vld [vmem:[%s0 + $0x14] sm:$0xf]
  %v94 = vld [vmem:[%s0 + $0x18] sm:$0xf]
  %v95 = vld [vmem:[%s0 + $0x1c] sm:$0xf]
  %v96 = vld [vmem:[%s0 + $0x20] sm:$0xf]
  %v97 = vld [vmem:[%s0 + $0x24] sm:$0xf]
  %v98 = vld [vmem:[%s0 + $0x28] sm:$0xf]
  %v99 = vld [vmem:[%s0 + $0x2c] sm:$0xf]
  %v100 = vld [vmem:[%s0 + $0x30] sm:$0xf]
  %v101 = vld [vmem:[%s0 + $0x34] sm:$0xf]
  %v102 = vld [vmem:[%s0 + $0x38] sm:$0xf]
  %v103 = vld [vmem:[%s0 + $0x3c] sm:$0xf]
  %v104 = vld [vmem:[%s3] sm:$0xf]
  %v105 = vld [vmem:[%s3 + $0x4] sm:$0xf]
  %v106 = vld [vmem:[%s3 + $0x8] sm:$0xf]
  %v107 = vld [vmem:[%s3 + $0xc] sm:$0xf]
  %v108 = vld [vmem:[%s3 + $0x10] sm:$0xf]
  %v109 = vld [vmem:[%s3 + $0x14] sm:$0xf]
  %v110 = vld [vmem:[%s3 + $0x18] sm:$0xf]
  %v111 = vld [vmem:[%s3 + $0x1c] sm:$0xf]
  %v112 = vld [vmem:[%s3 + $0x20] sm:$0xf]
  %v113 = vld [vmem:[%s3 + $0x24] sm:$0xf]
  %v114 = vld [vmem:[%s3 + $0x28] sm:$0xf]
  %v115 = vld [vmem:[%s3 + $0x2c] sm:$0xf]
  %v116 = vld [vmem:[%s3 + $0x30] sm:$0xf]
  %v117 = vld [vmem:[%s3 + $0x34] sm:$0xf]
  %v118 = vld [vmem:[%s3 + $0x38] sm:$0xf]
  %v119 = vld [vmem:[%s3 + $0x3c] sm:$0xf]
  %v120 = vld [vmem:[%s5] sm:$0x1]
  %v122 = vlaneseq
  %v123 = vshrl.u32 %v122, 7
  %v124 = vsub.s32 0, %v123
  %v125 = vrot.slane %v120, %v124
  %v143 = vunpack.c.l.b16 %v88
  %v144 = vunpack.c.l.b16 %v89
  %v145 = vunpack.c.l.b16 %v90
  %v146 = vunpack.c.l.b16 %v91
  %v147 = vunpack.c.l.b16 %v92
  %v148 = vunpack.c.l.b16 %v93
  %v149 = vunpack.c.l.b16 %v94
  %v150 = vunpack.c.l.b16 %v95
  %v151 = vunpack.c.l.b16 %v96
  %v152 = vunpack.c.l.b16 %v97
  %v153 = vunpack.c.l.b16 %v98
  %v154 = vunpack.c.l.b16 %v99
  %v155 = vunpack.c.l.b16 %v100
  %v156 = vunpack.c.l.b16 %v101
  %v157 = vunpack.c.l.b16 %v102
  %v158 = vunpack.c.l.b16 %v103
  %v159 = vpack.c.b16 %v144, %v143
  %v160 = vpack.c.b16 %v146, %v145
  %v161 = vpack.c.b16 %v148, %v147
  %v162 = vpack.c.b16 %v150, %v149
  %v163 = vpack.c.b16 %v152, %v151
  %v164 = vpack.c.b16 %v154, %v153
  %v165 = vpack.c.b16 %v156, %v155
  %v166 = vpack.c.b16 %v158, %v157
  %v191 = vunpack.c.l.b16 %v104
  %v192 = vunpack.c.l.b16 %v105
  %v193 = vunpack.c.l.b16 %v106
  %v194 = vunpack.c.l.b16 %v107
  %v195 = vunpack.c.l.b16 %v108
  %v196 = vunpack.c.l.b16 %v109
  %v197 = vunpack.c.l.b16 %v110
  %v198 = vunpack.c.l.b16 %v111
  %v199 = vunpack.c.l.b16 %v112
  %v200 = vunpack.c.l.b16 %v113
  %v201 = vunpack.c.l.b16 %v114
  %v202 = vunpack.c.l.b16 %v115
  %v203 = vunpack.c.l.b16 %v116
  %v204 = vunpack.c.l.b16 %v117
  %v205 = vunpack.c.l.b16 %v118
  %v206 = vunpack.c.l.b16 %v119
  %v207 = vpack.c.b16 %v192, %v191
  %v208 = vpack.c.b16 %v194, %v193
  %v209 = vpack.c.b16 %v196, %v195
  %v210 = vpack.c.b16 %v198, %v197
  %v211 = vpack.c.b16 %v200, %v199
  %v212 = vpack.c.b16 %v202, %v201
  %v213 = vpack.c.b16 %v204, %v203
  %v214 = vpack.c.b16 %v206, %v205
  %223 = vmatprep.subr.bf16.mxu0 0
  %224 = vmatpush1.bf16.msra.mxu0 %v207
  %225 = vmatprep.subr.bf16.mxu0 0
  %226 = vmatpush1.bf16.msra.mxu0 %v208
  %227 = vmatprep.subr.bf16.mxu0 0
  %228 = vmatpush1.bf16.msra.mxu0 %v209
  %229 = vmatprep.subr.bf16.mxu0 0
  %230 = vmatpush1.bf16.msra.mxu0 %v210
  %231 = vmatprep.subr.bf16.mxu0 0
  %232 = vmatpush1.bf16.msra.mxu0 %v211
  %233 = vmatprep.subr.bf16.mxu0 0
  %234 = vmatpush1.bf16.msra.mxu0 %v212
  %235 = vmatprep.subr.bf16.mxu0 0
  %236 = vmatpush1.bf16.msra.mxu0 %v213
  %237 = vmatprep.subr.bf16.mxu0 0
  %238 = vmatpush1.bf16.msra.mxu0 %v214
  %239 = vmatprep.subr.bf16.mxu0 0
  %240 = vmatpush1.bf16.msra.mxu0 0
  %241 = vmatprep.subr.bf16.mxu0 0
  %242 = vmatpush1.bf16.msra.mxu0 0
  %243 = vmatprep.subr.bf16.mxu0 0
  %244 = vmatpush1.bf16.msra.mxu0 0
  %245 = vmatprep.subr.bf16.mxu0 0
  %246 = vmatpush1.bf16.msra.mxu0 0
  %247 = vmatprep.subr.bf16.mxu0 0
  %248 = vmatpush1.bf16.msra.mxu0 0
  %249 = vmatprep.subr.bf16.mxu0 0
  %250 = vmatpush1.bf16.msra.mxu0 0
  %251 = vmatprep.subr.bf16.mxu0 0
  %252 = vmatpush1.bf16.msra.mxu0 0
  %253 = vmatprep.subr.bf16.mxu0 0
  %254 = vmatpush1.bf16.msra.mxu0 0
  %255 = vmatprep.mubr.bf16.mxu0 0
  %256 = vmatmul.mubr.bf16.gmra.mrb[0].mxu0 %v159
  %v257 = vpop.f32.mrb[0].mxu0
  %v258 = vadd.f32 %v125, %v257
  %v259 = vpop.f32.mrb[0].mxu0
  %v260 = vpop.f32.mrb[0].mxu0
  %v261 = vadd.f32 %v125, %v260
  %v262 = vpop.f32.mrb[0].mxu0
  %263 = vmatprep.mubr.bf16.mxu0 0
  %264 = vmatmul.mubr.bf16.gmra.mrb[0].mxu0 %v160
  %v265 = vpop.f32.mrb[0].mxu0
  %v266 = vadd.f32 %v125, %v265
  %v267 = vpop.f32.mrb[0].mxu0
  %v268 = vpop.f32.mrb[0].mxu0
  %v269 = vadd.f32 %v125, %v268
  %v270 = vpop.f32.mrb[0].mxu0
  %271 = vmatprep.mubr.bf16.mxu0 0
  %272 = vmatmul.mubr.bf16.gmra.mrb[0].mxu0 %v161
  %v273 = vpop.f32.mrb[0].mxu0
  %v274 = vadd.f32 %v125, %v273
  %v275 = vpop.f32.mrb[0].mxu0
  %v276 = vpop.f32.mrb[0].mxu0
  %v277 = vadd.f32 %v125, %v276
  %v278 = vpop.f32.mrb[0].mxu0
  %279 = vmatprep.mubr.bf16.mxu0 0
  %280 = vmatmul.mubr.bf16.gmra.mrb[0].mxu0 %v162
  %v281 = vpop.f32.mrb[0].mxu0
  %v282 = vadd.f32 %v125, %v281
  %v283 = vpop.f32.mrb[0].mxu0
  %v284 = vpop.f32.mrb[0].mxu0
  %v285 = vadd.f32 %v125, %v284
  %v286 = vpop.f32.mrb[0].mxu0
  %287 = vmatprep.mubr.bf16.mxu0 0
  %288 = vmatmul.mubr.bf16.gmra.mrb[0].mxu0 %v163
  %v289 = vpop.f32.mrb[0].mxu0
  %v290 = vadd.f32 %v125, %v289
  %v291 = vpop.f32.mrb[0].mxu0
  %v292 = vpop.f32.mrb[0].mxu0
  %v293 = vadd.f32 %v125, %v292
  %v294 = vpop.f32.mrb[0].mxu0
  %295 = vmatprep.mubr.bf16.mxu0 0
  %296 = vmatmul.mubr.bf16.gmra.mrb[0].mxu0 %v164
  %v297 = vpop.f32.mrb[0].mxu0
  %v298 = vadd.f32 %v125, %v297
  %v299 = vpop.f32.mrb[0].mxu0
  %v300 = vpop.f32.mrb[0].mxu0
  %v301 = vadd.f32 %v125, %v300
  %v302 = vpop.f32.mrb[0].mxu0
  %303 = vmatprep.mubr.bf16.mxu0 0
  %304 = vmatmul.mubr.bf16.gmra.mrb[0].mxu0 %v165
  %v305 = vpop.f32.mrb[0].mxu0
  %v306 = vadd.f32 %v125, %v305
  %v307 = vpop.f32.mrb[0].mxu0
  %v308 = vpop.f32.mrb[0].mxu0
  %v309 = vadd.f32 %v125, %v308
  %v310 = vpop.f32.mrb[0].mxu0
  %311 = vmatprep.mubr.bf16.mxu0 0
  %312 = vmatmul.mubr.bf16.gmra.mrb[0].mxu0 %v166
  %v313 = vpop.f32.mrb[0].mxu0
  %v314 = vadd.f32 %v125, %v313
  %v315 = vpop.f32.mrb[0].mxu0
  %v316 = vpop.f32.mrb[0].mxu0
  %v317 = vadd.f32 %v125, %v316
  %v318 = vpop.f32.mrb[0].mxu0
  %319 = vdwg.mxu0
  %v320 = vld [vmem:[%s1] sm:$0xf]
  %v321 = vld [vmem:[%s1 + $0x4] sm:$0xf]
  %v322 = vld [vmem:[%s1 + $0x8] sm:$0xf]
  %v323 = vld [vmem:[%s1 + $0xc] sm:$0xf]
  %v324 = vld [vmem:[%s1 + $0x10] sm:$0xf]
  %v325 = vld [vmem:[%s1 + $0x14] sm:$0xf]
  %v326 = vld [vmem:[%s1 + $0x18] sm:$0xf]
  %v327 = vld [vmem:[%s1 + $0x1c] sm:$0xf]
  %v328 = vld [vmem:[%s1 + $0x20] sm:$0xf]
  %v329 = vld [vmem:[%s1 + $0x24] sm:$0xf]
  %v330 = vld [vmem:[%s1 + $0x28] sm:$0xf]
  %v331 = vld [vmem:[%s1 + $0x2c] sm:$0xf]
  %v332 = vld [vmem:[%s1 + $0x30] sm:$0xf]
  %v333 = vld [vmem:[%s1 + $0x34] sm:$0xf]
  %v334 = vld [vmem:[%s1 + $0x38] sm:$0xf]
  %v335 = vld [vmem:[%s1 + $0x3c] sm:$0xf]
  %v336 = vld [vmem:[%s6] sm:$0xf]
  %v337 = vld [vmem:[%s6 + $0x4] sm:$0xf]
  %v338 = vld [vmem:[%s6 + $0x8] sm:$0xf]
  %v339 = vld [vmem:[%s6 + $0xc] sm:$0xf]
  %v340 = vld [vmem:[%s6 + $0x10] sm:$0xf]
  %v341 = vld [vmem:[%s6 + $0x14] sm:$0xf]
  %v342 = vld [vmem:[%s6 + $0x18] sm:$0xf]
  %v343 = vld [vmem:[%s6 + $0x1c] sm:$0xf]
  %v344 = vld [vmem:[%s6 + $0x20] sm:$0xf]
  %v345 = vld [vmem:[%s6 + $0x24] sm:$0xf]
  %v346 = vld [vmem:[%s6 + $0x28] sm:$0xf]
  %v347 = vld [vmem:[%s6 + $0x2c] sm:$0xf]
  %v348 = vld [vmem:[%s6 + $0x30] sm:$0xf]
  %v349 = vld [vmem:[%s6 + $0x34] sm:$0xf]
  %v350 = vld [vmem:[%s6 + $0x38] sm:$0xf]
  %v351 = vld [vmem:[%s6 + $0x3c] sm:$0xf]
  %v352 = vld [vmem:[%s8] sm:$0x1]
  %v354 = vlaneseq
  %v355 = vshrl.u32 %v354, 7
  %v356 = vsub.s32 0, %v355
  %v357 = vrot.slane %v352, %v356
  %v375 = vunpack.c.l.b16 %v320
  %v376 = vunpack.c.l.b16 %v321
  %v377 = vunpack.c.l.b16 %v322
  %v378 = vunpack.c.l.b16 %v323
  %v379 = vunpack.c.l.b16 %v324
  %v380 = vunpack.c.l.b16 %v325
  %v381 = vunpack.c.l.b16 %v326
  %v382 = vunpack.c.l.b16 %v327
  %v383 = vunpack.c.l.b16 %v328
  %v384 = vunpack.c.l.b16 %v329
  %v385 = vunpack.c.l.b16 %v330
  %v386 = vunpack.c.l.b16 %v331
  %v387 = vunpack.c.l.b16 %v332
  %v388 = vunpack.c.l.b16 %v333
  %v389 = vunpack.c.l.b16 %v334
  %v390 = vunpack.c.l.b16 %v335
  %v391 = vpack.c.b16 %v376, %v375
  %v392 = vpack.c.b16 %v378, %v377
  %v393 = vpack.c.b16 %v380, %v379
  %v394 = vpack.c.b16 %v382, %v381
  %v395 = vpack.c.b16 %v384, %v383
  %v396 = vpack.c.b16 %v386, %v385
  %v397 = vpack.c.b16 %v388, %v387
  %v398 = vpack.c.b16 %v390, %v389
  %v423 = vunpack.c.l.b16 %v336
  %v424 = vunpack.c.l.b16 %v337
  %v425 = vunpack.c.l.b16 %v338
  %v426 = vunpack.c.l.b16 %v339
  %v427 = vunpack.c.l.b16 %v340
  %v428 = vunpack.c.l.b16 %v341
  %v429 = vunpack.c.l.b16 %v342
  %v430 = vunpack.c.l.b16 %v343
  %v431 = vunpack.c.l.b16 %v344
  %v432 = vunpack.c.l.b16 %v345
  %v433 = vunpack.c.l.b16 %v346
  %v434 = vunpack.c.l.b16 %v347
  %v435 = vunpack.c.l.b16 %v348
  %v436 = vunpack.c.l.b16 %v349
  %v437 = vunpack.c.l.b16 %v350
  %v438 = vunpack.c.l.b16 %v351
  %v439 = vpack.c.b16 %v424, %v423
  %v440 = vpack.c.b16 %v426, %v425
  %v441 = vpack.c.b16 %v428, %v427
  %v442 = vpack.c.b16 %v430, %v429
  %v443 = vpack.c.b16 %v432, %v431
  %v444 = vpack.c.b16 %v434, %v433
  %v445 = vpack.c.b16 %v436, %v435
  %v446 = vpack.c.b16 %v438, %v437
  %455 = vmatprep.subr.bf16.mxu0 0
  %456 = vmatpush1.bf16.msra.mxu0 %v439
  %457 = vmatprep.subr.bf16.mxu0 0
  %458 = vmatpush1.bf16.msra.mxu0 %v440
  %459 = vmatprep.subr.bf16.mxu0 0
  %460 = vmatpush1.bf16.msra.mxu0 %v441
  %461 = vmatprep.subr.bf16.mxu0 0
  %462 = vmatpush1.bf16.msra.mxu0 %v442
  %463 = vmatprep.subr.bf16.mxu0 0
  %464 = vmatpush1.bf16.msra.mxu0 %v443
  %465 = vmatprep.subr.bf16.mxu0 0
  %466 = vmatpush1.bf16.msra.mxu0 %v444
  %467 = vmatprep.subr.bf16.mxu0 0
  %468 = vmatpush1.bf16.msra.mxu0 %v445
  %469 = vmatprep.subr.bf16.mxu0 0
  %470 = vmatpush1.bf16.msra.mxu0 %v446
  %471 = vmatprep.subr.bf16.mxu0 0
  %472 = vmatpush1.bf16.msra.mxu0 0
  %473 = vmatprep.subr.bf16.mxu0 0
  %474 = vmatpush1.bf16.msra.mxu0 0
  %475 = vmatprep.subr.bf16.mxu0 0
  %476 = vmatpush1.bf16.msra.mxu0 0
  %477 = vmatprep.subr.bf16.mxu0 0
  %478 = vmatpush1.bf16.msra.mxu0 0
  %479 = vmatprep.subr.bf16.mxu0 0
  %480 = vmatpush1.bf16.msra.mxu0 0
  %481 = vmatprep.subr.bf16.mxu0 0
  %482 = vmatpush1.bf16.msra.mxu0 0
  %483 = vmatprep.subr.bf16.mxu0 0
  %484 = vmatpush1.bf16.msra.mxu0 0
  %485 = vmatprep.subr.bf16.mxu0 0
  %486 = vmatpush1.bf16.msra.mxu0 0
  %487 = vmatprep.mubr.bf16.mxu0 0
  %488 = vmatmul.mubr.bf16.gmra.mrb[0].mxu0 %v391
  %v489 = vpop.f32.mrb[0].mxu0
  %v490 = vadd.f32 %v357, %v489
  %v491 = vpop.f32.mrb[0].mxu0
  %v492 = vpop.f32.mrb[0].mxu0
  %v493 = vadd.f32 %v357, %v492
  %v494 = vpop.f32.mrb[0].mxu0
  %495 = vmatprep.mubr.bf16.mxu0 0
  %496 = vmatmul.mubr.bf16.gmra.mrb[0].mxu0 %v392
  %v497 = vpop.f32.mrb[0].mxu0
  %v498 = vadd.f32 %v357, %v497
  %v499 = vpop.f32.mrb[0].mxu0
  %v500 = vpop.f32.mrb[0].mxu0
  %v501 = vadd.f32 %v357, %v500
  %v502 = vpop.f32.mrb[0].mxu0
  %503 = vmatprep.mubr.bf16.mxu0 0
  %504 = vmatmul.mubr.bf16.gmra.mrb[0].mxu0 %v393
  %v505 = vpop.f32.mrb[0].mxu0
  %v506 = vadd.f32 %v357, %v505
  %v507 = vpop.f32.mrb[0].mxu0
  %v508 = vpop.f32.mrb[0].mxu0
  %v509 = vadd.f32 %v357, %v508
  %v510 = vpop.f32.mrb[0].mxu0
  %511 = vmatprep.mubr.bf16.mxu0 0
  %512 = vmatmul.mubr.bf16.gmra.mrb[0].mxu0 %v394
  %v513 = vpop.f32.mrb[0].mxu0
  %v514 = vadd.f32 %v357, %v513
  %v515 = vpop.f32.mrb[0].mxu0
  %v516 = vpop.f32.mrb[0].mxu0
  %v517 = vadd.f32 %v357, %v516
  %v518 = vpop.f32.mrb[0].mxu0
  %519 = vmatprep.mubr.bf16.mxu0 0
  %520 = vmatmul.mubr.bf16.gmra.mrb[0].mxu0 %v395
  %v521 = vpop.f32.mrb[0].mxu0
  %v522 = vadd.f32 %v357, %v521
  %v523 = vpop.f32.mrb[0].mxu0
  %v524 = vpop.f32.mrb[0].mxu0
  %v525 = vadd.f32 %v357, %v524
  %v526 = vpop.f32.mrb[0].mxu0
  %527 = vmatprep.mubr.bf16.mxu0 0
  %528 = vmatmul.mubr.bf16.gmra.mrb[0].mxu0 %v396
  %v529 = vpop.f32.mrb[0].mxu0
  %v530 = vadd.f32 %v357, %v529
  %v531 = vpop.f32.mrb[0].mxu0
  %v532 = vpop.f32.mrb[0].mxu0
  %v533 = vadd.f32 %v357, %v532
  %v534 = vpop.f32.mrb[0].mxu0
  %535 = vmatprep.mubr.bf16.mxu0 0
  %536 = vmatmul.mubr.bf16.gmra.mrb[0].mxu0 %v397
  %v537 = vpop.f32.mrb[0].mxu0
  %v538 = vadd.f32 %v357, %v537
  %v539 = vpop.f32.mrb[0].mxu0
  %v540 = vpop.f32.mrb[0].mxu0
  %v541 = vadd.f32 %v357, %v540
  %v542 = vpop.f32.mrb[0].mxu0
  %543 = vmatprep.mubr.bf16.mxu0 0
  %544 = vmatmul.mubr.bf16.gmra.mrb[0].mxu0 %v398
  %v545 = vpop.f32.mrb[0].mxu0
  %v546 = vadd.f32 %v357, %v545
  %v547 = vpop.f32.mrb[0].mxu0
  %v548 = vpop.f32.mrb[0].mxu0
  %v549 = vadd.f32 %v357, %v548
  %v550 = vpop.f32.mrb[0].mxu0
  %551 = vdwg.mxu0
  %v552 = vld [vmem:[%s2] sm:$0xff]
  %v553 = vld [vmem:[%s2 + $0x8] sm:$0xff]
  %v554 = vpack.c.bf16 %v553, %v552
  %v571 = vunpack.c.l.b16 %v39
  %v572 = vunpack.c.l.b16 %v40
  %v573 = vunpack.c.l.b16 %v41
  %v574 = vunpack.c.l.b16 %v42
  %v575 = vunpack.c.l.b16 %v43
  %v576 = vunpack.c.l.b16 %v44
  %v577 = vunpack.c.l.b16 %v45
  %v578 = vunpack.c.l.b16 %v46
  %v579 = vunpack.c.l.b16 %v47
  %v580 = vunpack.c.l.b16 %v48
  %v581 = vunpack.c.l.b16 %v49
  %v582 = vunpack.c.l.b16 %v50
  %v583 = vunpack.c.l.b16 %v51
  %v584 = vunpack.c.l.b16 %v52
  %v585 = vunpack.c.l.b16 %v53
  %v586 = vunpack.c.l.b16 %v54
  %v587 = vpack.c.b16 %v572, %v571
  %v588 = vpack.c.b16 %v574, %v573
  %v589 = vpack.c.b16 %v576, %v575
  %v590 = vpack.c.b16 %v578, %v577
  %v591 = vpack.c.b16 %v580, %v579
  %v592 = vpack.c.b16 %v582, %v581
  %v593 = vpack.c.b16 %v584, %v583
  %v594 = vpack.c.b16 %v586, %v585
  %603 = vmatprep.subr.bf16.mxu0 0
  %604 = vmatpush1.bf16.msra.mxu0 %v587
  %605 = vmatprep.subr.bf16.mxu0 0
  %606 = vmatpush1.bf16.msra.mxu0 %v588
  %607 = vmatprep.subr.bf16.mxu0 0
  %608 = vmatpush1.bf16.msra.mxu0 %v589
  %609 = vmatprep.subr.bf16.mxu0 0
  %610 = vmatpush1.bf16.msra.mxu0 %v590
  %611 = vmatprep.subr.bf16.mxu0 0
  %612 = vmatpush1.bf16.msra.mxu0 %v591
  %613 = vmatprep.subr.bf16.mxu0 0
  %614 = vmatpush1.bf16.msra.mxu0 %v592
  %615 = vmatprep.subr.bf16.mxu0 0
  %616 = vmatpush1.bf16.msra.mxu0 %v593
  %617 = vmatprep.subr.bf16.mxu0 0
  %618 = vmatpush1.bf16.msra.mxu0 %v594
  %619 = vmatprep.subr.bf16.mxu0 0
  %620 = vmatpush1.bf16.msra.mxu0 0
  %621 = vmatprep.subr.bf16.mxu0 0
  %622 = vmatpush1.bf16.msra.mxu0 0
  %623 = vmatprep.subr.bf16.mxu0 0
  %624 = vmatpush1.bf16.msra.mxu0 0
  %625 = vmatprep.subr.bf16.mxu0 0
  %626 = vmatpush1.bf16.msra.mxu0 0
  %627 = vmatprep.subr.bf16.mxu0 0
  %628 = vmatpush1.bf16.msra.mxu0 0
  %629 = vmatprep.subr.bf16.mxu0 0
  %630 = vmatpush1.bf16.msra.mxu0 0
  %631 = vmatprep.subr.bf16.mxu0 0
  %632 = vmatpush1.bf16.msra.mxu0 0
  %633 = vmatprep.subr.bf16.mxu0 0
  %634 = vmatpush1.bf16.msra.mxu0 0
  %635 = vmatprep.mubr.bf16.mxu0 0
  %636 = vmatmul.mubr.bf16.gmra.mrb[0].mxu0 %v554
  %v637 = vpop.f32.mrb[0].mxu0
  %v638 = vadd.f32 0.0, %v637
  %v639 = vpop.f32.mrb[0].mxu0
  %v640 = vpop.f32.mrb[0].mxu0
  %v641 = vadd.f32 0.0, %v640
  %v642 = vpop.f32.mrb[0].mxu0
  %643 = vdwg.mxu0
  %v644 = vadd.f32 %v258, %v638
  %v645 = vadd.f32 %v261, %v641
  %v646 = vtanh.pop %v644
  %v647 = vtanh.pop %v645
  %v648 = vpack.c.bf16 %v647, %v646
  %649 = vmatprep.subr.bf16.mxu0 0
  %650 = vmatpush1.bf16.msra.mxu0 %v587
  %651 = vmatprep.subr.bf16.mxu0 0
  %652 = vmatpush1.bf16.msra.mxu0 %v588
  %653 = vmatprep.subr.bf16.mxu0 0
  %654 = vmatpush1.bf16.msra.mxu0 %v589
  %655 = vmatprep.subr.bf16.mxu0 0
  %656 = vmatpush1.bf16.msra.mxu0 %v590
  %657 = vmatprep.subr.bf16.mxu0 0
  %658 = vmatpush1.bf16.msra.mxu0 %v591
  %659 = vmatprep.subr.bf16.mxu0 0
  %660 = vmatpush1.bf16.msra.mxu0 %v592
  %661 = vmatprep.subr.bf16.mxu0 0
  %662 = vmatpush1.bf16.msra.mxu0 %v593
  %663 = vmatprep.subr.bf16.mxu0 0
  %664 = vmatpush1.bf16.msra.mxu0 %v594
  %665 = vmatprep.subr.bf16.mxu0 0
  %666 = vmatpush1.bf16.msra.mxu0 0
  %667 = vmatprep.subr.bf16.mxu0 0
  %668 = vmatpush1.bf16.msra.mxu0 0
  %669 = vmatprep.subr.bf16.mxu0 0
  %670 = vmatpush1.bf16.msra.mxu0 0
  %671 = vmatprep.subr.bf16.mxu0 0
  %672 = vmatpush1.bf16.msra.mxu0 0
  %673 = vmatprep.subr.bf16.mxu0 0
  %674 = vmatpush1.bf16.msra.mxu0 0
  %675 = vmatprep.subr.bf16.mxu0 0
  %676 = vmatpush1.bf16.msra.mxu0 0
  %677 = vmatprep.subr.bf16.mxu0 0
  %678 = vmatpush1.bf16.msra.mxu0 0
  %679 = vmatprep.subr.bf16.mxu0 0
  %680 = vmatpush1.bf16.msra.mxu0 0
  %681 = vmatprep.mubr.bf16.mxu0 0
  %682 = vmatmul.mubr.bf16.gmra.mrb[0].mxu0 %v648
  %v683 = vpop.f32.mrb[0].mxu0
  %v684 = vadd.f32 0.0, %v683
  %v685 = vpop.f32.mrb[0].mxu0
  %v686 = vpop.f32.mrb[0].mxu0
  %v687 = vadd.f32 0.0, %v686
  %v688 = vpop.f32.mrb[0].mxu0
  %689 = vdwg.mxu0
  %v690 = vadd.f32 %v266, %v684
  %v691 = vadd.f32 %v269, %v687
  %v692 = vtanh.pop %v690
  %v693 = vtanh.pop %v691
  %v694 = vpack.c.bf16 %v693, %v692
  %695 = vmatprep.subr.bf16.mxu0 0
  %696 = vmatpush1.bf16.msra.mxu0 %v587
  %697 = vmatprep.subr.bf16.mxu0 0
  %698 = vmatpush1.bf16.msra.mxu0 %v588
  %699 = vmatprep.subr.bf16.mxu0 0
  %700 = vmatpush1.bf16.msra.mxu0 %v589
  %701 = vmatprep.subr.bf16.mxu0 0
  %702 = vmatpush1.bf16.msra.mxu0 %v590
  %703 = vmatprep.subr.bf16.mxu0 0
  %704 = vmatpush1.bf16.msra.mxu0 %v591
  %705 = vmatprep.subr.bf16.mxu0 0
  %706 = vmatpush1.bf16.msra.mxu0 %v592
  %707 = vmatprep.subr.bf16.mxu0 0
  %708 = vmatpush1.bf16.msra.mxu0 %v593
  %709 = vmatprep.subr.bf16.mxu0 0
  %710 = vmatpush1.bf16.msra.mxu0 %v594
  %711 = vmatprep.subr.bf16.mxu0 0
  %712 = vmatpush1.bf16.msra.mxu0 0
  %713 = vmatprep.subr.bf16.mxu0 0
  %714 = vmatpush1.bf16.msra.mxu0 0
  %715 = vmatprep.subr.bf16.mxu0 0
  %716 = vmatpush1.bf16.msra.mxu0 0
  %717 = vmatprep.subr.bf16.mxu0 0
  %718 = vmatpush1.bf16.msra.mxu0 0
  %719 = vmatprep.subr.bf16.mxu0 0
  %720 = vmatpush1.bf16.msra.mxu0 0
  %721 = vmatprep.subr.bf16.mxu0 0
  %722 = vmatpush1.bf16.msra.mxu0 0
  %723 = vmatprep.subr.bf16.mxu0 0
  %724 = vmatpush1.bf16.msra.mxu0 0
  %725 = vmatprep.subr.bf16.mxu0 0
  %726 = vmatpush1.bf16.msra.mxu0 0
  %727 = vmatprep.mubr.bf16.mxu0 0
  %728 = vmatmul.mubr.bf16.gmra.mrb[0].mxu0 %v694
  %v729 = vpop.f32.mrb[0].mxu0
  %v730 = vadd.f32 0.0, %v729
  %v731 = vpop.f32.mrb[0].mxu0
  %v732 = vpop.f32.mrb[0].mxu0
  %v733 = vadd.f32 0.0, %v732
  %v734 = vpop.f32.mrb[0].mxu0
  %735 = vdwg.mxu0
  %v736 = vadd.f32 %v274, %v730
  %v737 = vadd.f32 %v277, %v733
  %v738 = vtanh.pop %v736
  %v739 = vtanh.pop %v737
  %v740 = vpack.c.bf16 %v739, %v738
  %741 = vmatprep.subr.bf16.mxu0 0
  %742 = vmatpush1.bf16.msra.mxu0 %v587
  %743 = vmatprep.subr.bf16.mxu0 0
  %744 = vmatpush1.bf16.msra.mxu0 %v588
  %745 = vmatprep.subr.bf16.mxu0 0
  %746 = vmatpush1.bf16.msra.mxu0 %v589
  %747 = vmatprep.subr.bf16.mxu0 0
  %748 = vmatpush1.bf16.msra.mxu0 %v590
  %749 = vmatprep.subr.bf16.mxu0 0
  %750 = vmatpush1.bf16.msra.mxu0 %v591
  %751 = vmatprep.subr.bf16.mxu0 0
  %752 = vmatpush1.bf16.msra.mxu0 %v592
  %753 = vmatprep.subr.bf16.mxu0 0
  %754 = vmatpush1.bf16.msra.mxu0 %v593
  %755 = vmatprep.subr.bf16.mxu0 0
  %756 = vmatpush1.bf16.msra.mxu0 %v594
  %757 = vmatprep.subr.bf16.mxu0 0
  %758 = vmatpush1.bf16.msra.mxu0 0
  %759 = vmatprep.subr.bf16.mxu0 0
  %760 = vmatpush1.bf16.msra.mxu0 0
  %761 = vmatprep.subr.bf16.mxu0 0
  %762 = vmatpush1.bf16.msra.mxu0 0
  %763 = vmatprep.subr.bf16.mxu0 0
  %764 = vmatpush1.bf16.msra.mxu0 0
  %765 = vmatprep.subr.bf16.mxu0 0
  %766 = vmatpush1.bf16.msra.mxu0 0
  %767 = vmatprep.subr.bf16.mxu0 0
  %768 = vmatpush1.bf16.msra.mxu0 0
  %769 = vmatprep.subr.bf16.mxu0 0
  %770 = vmatpush1.bf16.msra.mxu0 0
  %771 = vmatprep.subr.bf16.mxu0 0
  %772 = vmatpush1.bf16.msra.mxu0 0
  %773 = vmatprep.mubr.bf16.mxu0 0
  %774 = vmatmul.mubr.bf16.gmra.mrb[0].mxu0 %v740
  %v775 = vpop.f32.mrb[0].mxu0
  %v776 = vadd.f32 0.0, %v775
  %v777 = vpop.f32.mrb[0].mxu0
  %v778 = vpop.f32.mrb[0].mxu0
  %v779 = vadd.f32 0.0, %v778
  %v780 = vpop.f32.mrb[0].mxu0
  %781 = vdwg.mxu0
  %v782 = vadd.f32 %v282, %v776
  %v783 = vadd.f32 %v285, %v779
  %v784 = vtanh.pop %v782
  %v785 = vtanh.pop %v783
  %v786 = vpack.c.bf16 %v785, %v784
  %787 = vmatprep.subr.bf16.mxu0 0
  %788 = vmatpush1.bf16.msra.mxu0 %v587
  %789 = vmatprep.subr.bf16.mxu0 0
  %790 = vmatpush1.bf16.msra.mxu0 %v588
  %791 = vmatprep.subr.bf16.mxu0 0
  %792 = vmatpush1.bf16.msra.mxu0 %v589
  %793 = vmatprep.subr.bf16.mxu0 0
  %794 = vmatpush1.bf16.msra.mxu0 %v590
  %795 = vmatprep.subr.bf16.mxu0 0
  %796 = vmatpush1.bf16.msra.mxu0 %v591
  %797 = vmatprep.subr.bf16.mxu0 0
  %798 = vmatpush1.bf16.msra.mxu0 %v592
  %799 = vmatprep.subr.bf16.mxu0 0
  %800 = vmatpush1.bf16.msra.mxu0 %v593
  %801 = vmatprep.subr.bf16.mxu0 0
  %802 = vmatpush1.bf16.msra.mxu0 %v594
  %803 = vmatprep.subr.bf16.mxu0 0
  %804 = vmatpush1.bf16.msra.mxu0 0
  %805 = vmatprep.subr.bf16.mxu0 0
  %806 = vmatpush1.bf16.msra.mxu0 0
  %807 = vmatprep.subr.bf16.mxu0 0
  %808 = vmatpush1.bf16.msra.mxu0 0
  %809 = vmatprep.subr.bf16.mxu0 0
  %810 = vmatpush1.bf16.msra.mxu0 0
  %811 = vmatprep.subr.bf16.mxu0 0
  %812 = vmatpush1.bf16.msra.mxu0 0
  %813 = vmatprep.subr.bf16.mxu0 0
  %814 = vmatpush1.bf16.msra.mxu0 0
  %815 = vmatprep.subr.bf16.mxu0 0
  %816 = vmatpush1.bf16.msra.mxu0 0
  %817 = vmatprep.subr.bf16.mxu0 0
  %818 = vmatpush1.bf16.msra.mxu0 0
  %819 = vmatprep.mubr.bf16.mxu0 0
  %820 = vmatmul.mubr.bf16.gmra.mrb[0].mxu0 %v786
  %v821 = vpop.f32.mrb[0].mxu0
  %v822 = vadd.f32 0.0, %v821
  %v823 = vpop.f32.mrb[0].mxu0
  %v824 = vpop.f32.mrb[0].mxu0
  %v825 = vadd.f32 0.0, %v824
  %v826 = vpop.f32.mrb[0].mxu0
  %827 = vdwg.mxu0
  %v828 = vadd.f32 %v290, %v822
  %v829 = vadd.f32 %v293, %v825
  %v830 = vtanh.pop %v828
  %v831 = vtanh.pop %v829
  %v832 = vpack.c.bf16 %v831, %v830
  %833 = vmatprep.subr.bf16.mxu0 0
  %834 = vmatpush1.bf16.msra.mxu0 %v587
  %835 = vmatprep.subr.bf16.mxu0 0
  %836 = vmatpush1.bf16.msra.mxu0 %v588
  %837 = vmatprep.subr.bf16.mxu0 0
  %838 = vmatpush1.bf16.msra.mxu0 %v589
  %839 = vmatprep.subr.bf16.mxu0 0
  %840 = vmatpush1.bf16.msra.mxu0 %v590
  %841 = vmatprep.subr.bf16.mxu0 0
  %842 = vmatpush1.bf16.msra.mxu0 %v591
  %843 = vmatprep.subr.bf16.mxu0 0
  %844 = vmatpush1.bf16.msra.mxu0 %v592
  %845 = vmatprep.subr.bf16.mxu0 0
  %846 = vmatpush1.bf16.msra.mxu0 %v593
  %847 = vmatprep.subr.bf16.mxu0 0
  %848 = vmatpush1.bf16.msra.mxu0 %v594
  %849 = vmatprep.subr.bf16.mxu0 0
  %850 = vmatpush1.bf16.msra.mxu0 0
  %851 = vmatprep.subr.bf16.mxu0 0
  %852 = vmatpush1.bf16.msra.mxu0 0
  %853 = vmatprep.subr.bf16.mxu0 0
  %854 = vmatpush1.bf16.msra.mxu0 0
  %855 = vmatprep.subr.bf16.mxu0 0
  %856 = vmatpush1.bf16.msra.mxu0 0
  %857 = vmatprep.subr.bf16.mxu0 0
  %858 = vmatpush1.bf16.msra.mxu0 0
  %859 = vmatprep.subr.bf16.mxu0 0
  %860 = vmatpush1.bf16.msra.mxu0 0
  %861 = vmatprep.subr.bf16.mxu0 0
  %862 = vmatpush1.bf16.msra.mxu0 0
  %863 = vmatprep.subr.bf16.mxu0 0
  %864 = vmatpush1.bf16.msra.mxu0 0
  %865 = vmatprep.mubr.bf16.mxu0 0
  %866 = vmatmul.mubr.bf16.gmra.mrb[0].mxu0 %v832
  %v867 = vpop.f32.mrb[0].mxu0
  %v868 = vadd.f32 0.0, %v867
  %v869 = vpop.f32.mrb[0].mxu0
  %v870 = vpop.f32.mrb[0].mxu0
  %v871 = vadd.f32 0.0, %v870
  %v872 = vpop.f32.mrb[0].mxu0
  %873 = vdwg.mxu0
  %v874 = vadd.f32 %v298, %v868
  %v875 = vadd.f32 %v301, %v871
  %v876 = vtanh.pop %v874
  %v877 = vtanh.pop %v875
  %v878 = vpack.c.bf16 %v877, %v876
  %879 = vmatprep.subr.bf16.mxu0 0
  %880 = vmatpush1.bf16.msra.mxu0 %v587
  %881 = vmatprep.subr.bf16.mxu0 0
  %882 = vmatpush1.bf16.msra.mxu0 %v588
  %883 = vmatprep.subr.bf16.mxu0 0
  %884 = vmatpush1.bf16.msra.mxu0 %v589
  %885 = vmatprep.subr.bf16.mxu0 0
  %886 = vmatpush1.bf16.msra.mxu0 %v590
  %887 = vmatprep.subr.bf16.mxu0 0
  %888 = vmatpush1.bf16.msra.mxu0 %v591
  %889 = vmatprep.subr.bf16.mxu0 0
  %890 = vmatpush1.bf16.msra.mxu0 %v592
  %891 = vmatprep.subr.bf16.mxu0 0
  %892 = vmatpush1.bf16.msra.mxu0 %v593
  %893 = vmatprep.subr.bf16.mxu0 0
  %894 = vmatpush1.bf16.msra.mxu0 %v594
  %895 = vmatprep.subr.bf16.mxu0 0
  %896 = vmatpush1.bf16.msra.mxu0 0
  %897 = vmatprep.subr.bf16.mxu0 0
  %898 = vmatpush1.bf16.msra.mxu0 0
  %899 = vmatprep.subr.bf16.mxu0 0
  %900 = vmatpush1.bf16.msra.mxu0 0
  %901 = vmatprep.subr.bf16.mxu0 0
  %902 = vmatpush1.bf16.msra.mxu0 0
  %903 = vmatprep.subr.bf16.mxu0 0
  %904 = vmatpush1.bf16.msra.mxu0 0
  %905 = vmatprep.subr.bf16.mxu0 0
  %906 = vmatpush1.bf16.msra.mxu0 0
  %907 = vmatprep.subr.bf16.mxu0 0
  %908 = vmatpush1.bf16.msra.mxu0 0
  %909 = vmatprep.subr.bf16.mxu0 0
  %910 = vmatpush1.bf16.msra.mxu0 0
  %911 = vmatprep.mubr.bf16.mxu0 0
  %912 = vmatmul.mubr.bf16.gmra.mrb[0].mxu0 %v878
  %v913 = vpop.f32.mrb[0].mxu0
  %v914 = vadd.f32 0.0, %v913
  %v915 = vpop.f32.mrb[0].mxu0
  %v916 = vpop.f32.mrb[0].mxu0
  %v917 = vadd.f32 0.0, %v916
  %v918 = vpop.f32.mrb[0].mxu0
  %919 = vdwg.mxu0
  %v920 = vadd.f32 %v306, %v914
  %v921 = vadd.f32 %v309, %v917
  %v922 = vtanh.pop %v920
  %v923 = vtanh.pop %v921
  %v924 = vpack.c.bf16 %v923, %v922
  %925 = vmatprep.subr.bf16.mxu0 0
  %926 = vmatpush1.bf16.msra.mxu0 %v587
  %927 = vmatprep.subr.bf16.mxu0 0
  %928 = vmatpush1.bf16.msra.mxu0 %v588
  %929 = vmatprep.subr.bf16.mxu0 0
  %930 = vmatpush1.bf16.msra.mxu0 %v589
  %931 = vmatprep.subr.bf16.mxu0 0
  %932 = vmatpush1.bf16.msra.mxu0 %v590
  %933 = vmatprep.subr.bf16.mxu0 0
  %934 = vmatpush1.bf16.msra.mxu0 %v591
  %935 = vmatprep.subr.bf16.mxu0 0
  %936 = vmatpush1.bf16.msra.mxu0 %v592
  %937 = vmatprep.subr.bf16.mxu0 0
  %938 = vmatpush1.bf16.msra.mxu0 %v593
  %939 = vmatprep.subr.bf16.mxu0 0
  %940 = vmatpush1.bf16.msra.mxu0 %v594
  %941 = vmatprep.subr.bf16.mxu0 0
  %942 = vmatpush1.bf16.msra.mxu0 0
  %943 = vmatprep.subr.bf16.mxu0 0
  %944 = vmatpush1.bf16.msra.mxu0 0
  %945 = vmatprep.subr.bf16.mxu0 0
  %946 = vmatpush1.bf16.msra.mxu0 0
  %947 = vmatprep.subr.bf16.mxu0 0
  %948 = vmatpush1.bf16.msra.mxu0 0
  %949 = vmatprep.subr.bf16.mxu0 0
  %950 = vmatpush1.bf16.msra.mxu0 0
  %951 = vmatprep.subr.bf16.mxu0 0
  %952 = vmatpush1.bf16.msra.mxu0 0
  %953 = vmatprep.subr.bf16.mxu0 0
  %954 = vmatpush1.bf16.msra.mxu0 0
  %955 = vmatprep.subr.bf16.mxu0 0
  %956 = vmatpush1.bf16.msra.mxu0 0
  %957 = vmatprep.mubr.bf16.mxu0 0
  %958 = vmatmul.mubr.bf16.gmra.mrb[0].mxu0 %v924
  %v959 = vpop.f32.mrb[0].mxu0
  %v960 = vadd.f32 0.0, %v959
  %v961 = vpop.f32.mrb[0].mxu0
  %v962 = vpop.f32.mrb[0].mxu0
  %v963 = vadd.f32 0.0, %v962
  %v964 = vpop.f32.mrb[0].mxu0
  %965 = vdwg.mxu0
  %v966 = vadd.f32 %v314, %v960
  %v967 = vadd.f32 %v317, %v963
  %v968 = vtanh.pop %v966
  %v969 = vtanh.pop %v967
  %v970 = vpack.c.bf16 %v969, %v968
  %v987 = vunpack.c.l.b16 %v55
  %v988 = vunpack.c.l.b16 %v56
  %v989 = vunpack.c.l.b16 %v57
  %v990 = vunpack.c.l.b16 %v58
  %v991 = vunpack.c.l.b16 %v59
  %v992 = vunpack.c.l.b16 %v60
  %v993 = vunpack.c.l.b16 %v61
  %v994 = vunpack.c.l.b16 %v62
  %v995 = vunpack.c.l.b16 %v63
  %v996 = vunpack.c.l.b16 %v64
  %v997 = vunpack.c.l.b16 %v65
  %v998 = vunpack.c.l.b16 %v66
  %v999 = vunpack.c.l.b16 %v67
  %v1000 = vunpack.c.l.b16 %v68
  %v1001 = vunpack.c.l.b16 %v69
  %v1002 = vunpack.c.l.b16 %v70
  %v1003 = vpack.c.b16 %v988, %v987
  %v1004 = vpack.c.b16 %v990, %v989
  %v1005 = vpack.c.b16 %v992, %v991
  %v1006 = vpack.c.b16 %v994, %v993
  %v1007 = vpack.c.b16 %v996, %v995
  %v1008 = vpack.c.b16 %v998, %v997
  %v1009 = vpack.c.b16 %v1000, %v999
  %v1010 = vpack.c.b16 %v1002, %v1001
  %1019 = vmatprep.subr.bf16.mxu0 0
  %1020 = vmatpush1.bf16.msra.mxu0 %v1003
  %1021 = vmatprep.subr.bf16.mxu0 0
  %1022 = vmatpush1.bf16.msra.mxu0 %v1004
  %1023 = vmatprep.subr.bf16.mxu0 0
  %1024 = vmatpush1.bf16.msra.mxu0 %v1005
  %1025 = vmatprep.subr.bf16.mxu0 0
  %1026 = vmatpush1.bf16.msra.mxu0 %v1006
  %1027 = vmatprep.subr.bf16.mxu0 0
  %1028 = vmatpush1.bf16.msra.mxu0 %v1007
  %1029 = vmatprep.subr.bf16.mxu0 0
  %1030 = vmatpush1.bf16.msra.mxu0 %v1008
  %1031 = vmatprep.subr.bf16.mxu0 0
  %1032 = vmatpush1.bf16.msra.mxu0 %v1009
  %1033 = vmatprep.subr.bf16.mxu0 0
  %1034 = vmatpush1.bf16.msra.mxu0 %v1010
  %1035 = vmatprep.subr.bf16.mxu0 0
  %1036 = vmatpush1.bf16.msra.mxu0 0
  %1037 = vmatprep.subr.bf16.mxu0 0
  %1038 = vmatpush1.bf16.msra.mxu0 0
  %1039 = vmatprep.subr.bf16.mxu0 0
  %1040 = vmatpush1.bf16.msra.mxu0 0
  %1041 = vmatprep.subr.bf16.mxu0 0
  %1042 = vmatpush1.bf16.msra.mxu0 0
  %1043 = vmatprep.subr.bf16.mxu0 0
  %1044 = vmatpush1.bf16.msra.mxu0 0
  %1045 = vmatprep.subr.bf16.mxu0 0
  %1046 = vmatpush1.bf16.msra.mxu0 0
  %1047 = vmatprep.subr.bf16.mxu0 0
  %1048 = vmatpush1.bf16.msra.mxu0 0
  %1049 = vmatprep.subr.bf16.mxu0 0
  %1050 = vmatpush1.bf16.msra.mxu0 0
  %1051 = vmatprep.mubr.bf16.mxu0 0
  %1052 = vmatmul.mubr.bf16.gmra.mrb[0].mxu0 %v970
  %v1053 = vpop.f32.mrb[0].mxu0
  %v1054 = vadd.f32 0.0, %v1053
  %v1055 = vpop.f32.mrb[0].mxu0
  %v1056 = vpop.f32.mrb[0].mxu0
  %v1057 = vadd.f32 0.0, %v1056
  %v1058 = vpop.f32.mrb[0].mxu0
  %1059 = vdwg.mxu0
  %v1060 = vadd.f32 %v490, %v1054
  %v1061 = vadd.f32 %v493, %v1057
  %v1062 = vtanh.pop %v1060
  %v1063 = vtanh.pop %v1061
  %v1064 = vpack.c.bf16 %v1063, %v1062
  %v1066 = vlaneseq
  %v1067 = vshrl.u32 %v1066, 7
  %v1068 = vsub.s32 0, %v1067
  %v1069 = vrot.slane %v87, %v1068
  %v1087 = vunpack.c.l.b16 %v71
  %v1088 = vunpack.c.l.b16 %v72
  %v1089 = vunpack.c.l.b16 %v73
  %v1090 = vunpack.c.l.b16 %v74
  %v1091 = vunpack.c.l.b16 %v75
  %v1092 = vunpack.c.l.b16 %v76
  %v1093 = vunpack.c.l.b16 %v77
  %v1094 = vunpack.c.l.b16 %v78
  %v1095 = vunpack.c.l.b16 %v79
  %v1096 = vunpack.c.l.b16 %v80
  %v1097 = vunpack.c.l.b16 %v81
  %v1098 = vunpack.c.l.b16 %v82
  %v1099 = vunpack.c.l.b16 %v83
  %v1100 = vunpack.c.l.b16 %v84
  %v1101 = vunpack.c.l.b16 %v85
  %v1102 = vunpack.c.l.b16 %v86
  %v1103 = vpack.c.b16 %v1088, %v1087
  %v1104 = vpack.c.b16 %v1090, %v1089
  %v1105 = vpack.c.b16 %v1092, %v1091
  %v1106 = vpack.c.b16 %v1094, %v1093
  %v1107 = vpack.c.b16 %v1096, %v1095
  %v1108 = vpack.c.b16 %v1098, %v1097
  %v1109 = vpack.c.b16 %v1100, %v1099
  %v1110 = vpack.c.b16 %v1102, %v1101
  %1119 = vmatprep.subr.bf16.mxu0 0
  %1120 = vmatpush1.bf16.msra.mxu0 %v1103
  %1121 = vmatprep.subr.bf16.mxu0 0
  %1122 = vmatpush1.bf16.msra.mxu0 %v1104
  %1123 = vmatprep.subr.bf16.mxu0 0
  %1124 = vmatpush1.bf16.msra.mxu0 %v1105
  %1125 = vmatprep.subr.bf16.mxu0 0
  %1126 = vmatpush1.bf16.msra.mxu0 %v1106
  %1127 = vmatprep.subr.bf16.mxu0 0
  %1128 = vmatpush1.bf16.msra.mxu0 %v1107
  %1129 = vmatprep.subr.bf16.mxu0 0
  %1130 = vmatpush1.bf16.msra.mxu0 %v1108
  %1131 = vmatprep.subr.bf16.mxu0 0
  %1132 = vmatpush1.bf16.msra.mxu0 %v1109
  %1133 = vmatprep.subr.bf16.mxu0 0
  %1134 = vmatpush1.bf16.msra.mxu0 %v1110
  %1135 = vmatprep.subr.bf16.mxu0 0
  %1136 = vmatpush1.bf16.msra.mxu0 0
  %1137 = vmatprep.subr.bf16.mxu0 0
  %1138 = vmatpush1.bf16.msra.mxu0 0
  %1139 = vmatprep.subr.bf16.mxu0 0
  %1140 = vmatpush1.bf16.msra.mxu0 0
  %1141 = vmatprep.subr.bf16.mxu0 0
  %1142 = vmatpush1.bf16.msra.mxu0 0
  %1143 = vmatprep.subr.bf16.mxu0 0
  %1144 = vmatpush1.bf16.msra.mxu0 0
  %1145 = vmatprep.subr.bf16.mxu0 0
  %1146 = vmatpush1.bf16.msra.mxu0 0
  %1147 = vmatprep.subr.bf16.mxu0 0
  %1148 = vmatpush1.bf16.msra.mxu0 0
  %1149 = vmatprep.subr.bf16.mxu0 0
  %1150 = vmatpush1.bf16.msra.mxu0 0
  %1151 = vmatprep.mubr.bf16.mxu0 0
  %1152 = vmatmul.mubr.bf16.gmra.mrb[0].mxu0 %v1064
  %v1153 = vpop.f32.mrb[0].mxu0
  %v1154 = vadd.f32 %v1069, %v1153
  %v1155 = vpop.f32.mrb[0].mxu0
  %v1156 = vpop.f32.mrb[0].mxu0
  %v1157 = vadd.f32 %v1069, %v1156
  %v1158 = vpop.f32.mrb[0].mxu0
  %1159 = vdwg.mxu0
  %1160 = vst [vmem:[%s11] sm:$0xff] %v1154
  %1161 = vst [vmem:[%s11 + $0x8] sm:$0xff] %v1157
  %1162 = vmatprep.subr.bf16.mxu0 0
  %1163 = vmatpush1.bf16.msra.mxu0 %v1003
  %1164 = vmatprep.subr.bf16.mxu0 0
  %1165 = vmatpush1.bf16.msra.mxu0 %v1004
  %1166 = vmatprep.subr.bf16.mxu0 0
  %1167 = vmatpush1.bf16.msra.mxu0 %v1005
  %1168 = vmatprep.subr.bf16.mxu0 0
  %1169 = vmatpush1.bf16.msra.mxu0 %v1006
  %1170 = vmatprep.subr.bf16.mxu0 0
  %1171 = vmatpush1.bf16.msra.mxu0 %v1007
  %1172 = vmatprep.subr.bf16.mxu0 0
  %1173 = vmatpush1.bf16.msra.mxu0 %v1008
  %1174 = vmatprep.subr.bf16.mxu0 0
  %1175 = vmatpush1.bf16.msra.mxu0 %v1009
  %1176 = vmatprep.subr.bf16.mxu0 0
  %1177 = vmatpush1.bf16.msra.mxu0 %v1010
  %1178 = vmatprep.subr.bf16.mxu0 0
  %1179 = vmatpush1.bf16.msra.mxu0 0
  %1180 = vmatprep.subr.bf16.mxu0 0
  %1181 = vmatpush1.bf16.msra.mxu0 0
  %1182 = vmatprep.subr.bf16.mxu0 0
  %1183 = vmatpush1.bf16.msra.mxu0 0
  %1184 = vmatprep.subr.bf16.mxu0 0
  %1185 = vmatpush1.bf16.msra.mxu0 0
  %1186 = vmatprep.subr.bf16.mxu0 0
  %1187 = vmatpush1.bf16.msra.mxu0 0
  %1188 = vmatprep.subr.bf16.mxu0 0
  %1189 = vmatpush1.bf16.msra.mxu0 0
  %1190 = vmatprep.subr.bf16.mxu0 0
  %1191 = vmatpush1.bf16.msra.mxu0 0
  %1192 = vmatprep.subr.bf16.mxu0 0
  %1193 = vmatpush1.bf16.msra.mxu0 0
  %1194 = vmatprep.mubr.bf16.mxu0 0
  %1195 = vmatmul.mubr.bf16.gmra.mrb[0].mxu0 %v1064
  %v1196 = vpop.f32.mrb[0].mxu0
  %v1197 = vadd.f32 0.0, %v1196
  %v1198 = vpop.f32.mrb[0].mxu0
  %v1199 = vpop.f32.mrb[0].mxu0
  %v1200 = vadd.f32 0.0, %v1199
  %v1201 = vpop.f32.mrb[0].mxu0
  %1202 = vdwg.mxu0
  %v1203 = vadd.f32 %v498, %v1197
  %v1204 = vadd.f32 %v501, %v1200
  %v1205 = vtanh.pop %v1203
  %v1206 = vtanh.pop %v1204
  %v1207 = vpack.c.bf16 %v1206, %v1205
  %1208 = vmatprep.subr.bf16.mxu0 0
  %1209 = vmatpush1.bf16.msra.mxu0 %v1103
  %1210 = vmatprep.subr.bf16.mxu0 0
  %1211 = vmatpush1.bf16.msra.mxu0 %v1104
  %1212 = vmatprep.subr.bf16.mxu0 0
  %1213 = vmatpush1.bf16.msra.mxu0 %v1105
  %1214 = vmatprep.subr.bf16.mxu0 0
  %1215 = vmatpush1.bf16.msra.mxu0 %v1106
  %1216 = vmatprep.subr.bf16.mxu0 0
  %1217 = vmatpush1.bf16.msra.mxu0 %v1107
  %1218 = vmatprep.subr.bf16.mxu0 0
  %1219 = vmatpush1.bf16.msra.mxu0 %v1108
  %1220 = vmatprep.subr.bf16.mxu0 0
  %1221 = vmatpush1.bf16.msra.mxu0 %v1109
  %1222 = vmatprep.subr.bf16.mxu0 0
  %1223 = vmatpush1.bf16.msra.mxu0 %v1110
  %1224 = vmatprep.subr.bf16.mxu0 0
  %1225 = vmatpush1.bf16.msra.mxu0 0
  %1226 = vmatprep.subr.bf16.mxu0 0
  %1227 = vmatpush1.bf16.msra.mxu0 0
  %1228 = vmatprep.subr.bf16.mxu0 0
  %1229 = vmatpush1.bf16.msra.mxu0 0
  %1230 = vmatprep.subr.bf16.mxu0 0
  %1231 = vmatpush1.bf16.msra.mxu0 0
  %1232 = vmatprep.subr.bf16.mxu0 0
  %1233 = vmatpush1.bf16.msra.mxu0 0
  %1234 = vmatprep.subr.bf16.mxu0 0
  %1235 = vmatpush1.bf16.msra.mxu0 0
  %1236 = vmatprep.subr.bf16.mxu0 0
  %1237 = vmatpush1.bf16.msra.mxu0 0
  %1238 = vmatprep.subr.bf16.mxu0 0
  %1239 = vmatpush1.bf16.msra.mxu0 0
  %1240 = vmatprep.mubr.bf16.mxu0 0
  %1241 = vmatmul.mubr.bf16.gmra.mrb[0].mxu0 %v1207
  %v1242 = vpop.f32.mrb[0].mxu0
  %v1243 = vadd.f32 %v1069, %v1242
  %v1244 = vpop.f32.mrb[0].mxu0
  %v1245 = vpop.f32.mrb[0].mxu0
  %v1246 = vadd.f32 %v1069, %v1245
  %v1247 = vpop.f32.mrb[0].mxu0
  %1248 = vdwg.mxu0
  %1249 = vst [vmem:[%s11 + $0x10] sm:$0xff] %v1243
  %1250 = vst [vmem:[%s11 + $0x18] sm:$0xff] %v1246
  %1251 = vmatprep.subr.bf16.mxu0 0
  %1252 = vmatpush1.bf16.msra.mxu0 %v1003
  %1253 = vmatprep.subr.bf16.mxu0 0
  %1254 = vmatpush1.bf16.msra.mxu0 %v1004
  %1255 = vmatprep.subr.bf16.mxu0 0
  %1256 = vmatpush1.bf16.msra.mxu0 %v1005
  %1257 = vmatprep.subr.bf16.mxu0 0
  %1258 = vmatpush1.bf16.msra.mxu0 %v1006
  %1259 = vmatprep.subr.bf16.mxu0 0
  %1260 = vmatpush1.bf16.msra.mxu0 %v1007
  %1261 = vmatprep.subr.bf16.mxu0 0
  %1262 = vmatpush1.bf16.msra.mxu0 %v1008
  %1263 = vmatprep.subr.bf16.mxu0 0
  %1264 = vmatpush1.bf16.msra.mxu0 %v1009
  %1265 = vmatprep.subr.bf16.mxu0 0
  %1266 = vmatpush1.bf16.msra.mxu0 %v1010
  %1267 = vmatprep.subr.bf16.mxu0 0
  %1268 = vmatpush1.bf16.msra.mxu0 0
  %1269 = vmatprep.subr.bf16.mxu0 0
  %1270 = vmatpush1.bf16.msra.mxu0 0
  %1271 = vmatprep.subr.bf16.mxu0 0
  %1272 = vmatpush1.bf16.msra.mxu0 0
  %1273 = vmatprep.subr.bf16.mxu0 0
  %1274 = vmatpush1.bf16.msra.mxu0 0
  %1275 = vmatprep.subr.bf16.mxu0 0
  %1276 = vmatpush1.bf16.msra.mxu0 0
  %1277 = vmatprep.subr.bf16.mxu0 0
  %1278 = vmatpush1.bf16.msra.mxu0 0
  %1279 = vmatprep.subr.bf16.mxu0 0
  %1280 = vmatpush1.bf16.msra.mxu0 0
  %1281 = vmatprep.subr.bf16.mxu0 0
  %1282 = vmatpush1.bf16.msra.mxu0 0
  %1283 = vmatprep.mubr.bf16.mxu0 0
  %1284 = vmatmul.mubr.bf16.gmra.mrb[0].mxu0 %v1207
  %v1285 = vpop.f32.mrb[0].mxu0
  %v1286 = vadd.f32 0.0, %v1285
  %v1287 = vpop.f32.mrb[0].mxu0
  %v1288 = vpop.f32.mrb[0].mxu0
  %v1289 = vadd.f32 0.0, %v1288
  %v1290 = vpop.f32.mrb[0].mxu0
  %1291 = vdwg.mxu0
  %v1292 = vadd.f32 %v506, %v1286
  %v1293 = vadd.f32 %v509, %v1289
  %v1294 = vtanh.pop %v1292
  %v1295 = vtanh.pop %v1293
  %v1296 = vpack.c.bf16 %v1295, %v1294
  %1297 = vmatprep.subr.bf16.mxu0 0
  %1298 = vmatpush1.bf16.msra.mxu0 %v1103
  %1299 = vmatprep.subr.bf16.mxu0 0
  %1300 = vmatpush1.bf16.msra.mxu0 %v1104
  %1301 = vmatprep.subr.bf16.mxu0 0
  %1302 = vmatpush1.bf16.msra.mxu0 %v1105
  %1303 = vmatprep.subr.bf16.mxu0 0
  %1304 = vmatpush1.bf16.msra.mxu0 %v1106
  %1305 = vmatprep.subr.bf16.mxu0 0
  %1306 = vmatpush1.bf16.msra.mxu0 %v1107
  %1307 = vmatprep.subr.bf16.mxu0 0
  %1308 = vmatpush1.bf16.msra.mxu0 %v1108
  %1309 = vmatprep.subr.bf16.mxu0 0
  %1310 = vmatpush1.bf16.msra.mxu0 %v1109
  %1311 = vmatprep.subr.bf16.mxu0 0
  %1312 = vmatpush1.bf16.msra.mxu0 %v1110
  %1313 = vmatprep.subr.bf16.mxu0 0
  %1314 = vmatpush1.bf16.msra.mxu0 0
  %1315 = vmatprep.subr.bf16.mxu0 0
  %1316 = vmatpush1.bf16.msra.mxu0 0
  %1317 = vmatprep.subr.bf16.mxu0 0
  %1318 = vmatpush1.bf16.msra.mxu0 0
  %1319 = vmatprep.subr.bf16.mxu0 0
  %1320 = vmatpush1.bf16.msra.mxu0 0
  %1321 = vmatprep.subr.bf16.mxu0 0
  %1322 = vmatpush1.bf16.msra.mxu0 0
  %1323 = vmatprep.subr.bf16.mxu0 0
  %1324 = vmatpush1.bf16.msra.mxu0 0
  %1325 = vmatprep.subr.bf16.mxu0 0
  %1326 = vmatpush1.bf16.msra.mxu0 0
  %1327 = vmatprep.subr.bf16.mxu0 0
  %1328 = vmatpush1.bf16.msra.mxu0 0
  %1329 = vmatprep.mubr.bf16.mxu0 0
  %1330 = vmatmul.mubr.bf16.gmra.mrb[0].mxu0 %v1296
  %v1331 = vpop.f32.mrb[0].mxu0
  %v1332 = vadd.f32 %v1069, %v1331
  %v1333 = vpop.f32.mrb[0].mxu0
  %v1334 = vpop.f32.mrb[0].mxu0
  %v1335 = vadd.f32 %v1069, %v1334
  %v1336 = vpop.f32.mrb[0].mxu0
  %1337 = vdwg.mxu0
  %1338 = vst [vmem:[%s11 + $0x20] sm:$0xff] %v1332
  %1339 = vst [vmem:[%s11 + $0x28] sm:$0xff] %v1335
  %1340 = vmatprep.subr.bf16.mxu0 0
  %1341 = vmatpush1.bf16.msra.mxu0 %v1003
  %1342 = vmatprep.subr.bf16.mxu0 0
  %1343 = vmatpush1.bf16.msra.mxu0 %v1004
  %1344 = vmatprep.subr.bf16.mxu0 0
  %1345 = vmatpush1.bf16.msra.mxu0 %v1005
  %1346 = vmatprep.subr.bf16.mxu0 0
  %1347 = vmatpush1.bf16.msra.mxu0 %v1006
  %1348 = vmatprep.subr.bf16.mxu0 0
  %1349 = vmatpush1.bf16.msra.mxu0 %v1007
  %1350 = vmatprep.subr.bf16.mxu0 0
  %1351 = vmatpush1.bf16.msra.mxu0 %v1008
  %1352 = vmatprep.subr.bf16.mxu0 0
  %1353 = vmatpush1.bf16.msra.mxu0 %v1009
  %1354 = vmatprep.subr.bf16.mxu0 0
  %1355 = vmatpush1.bf16.msra.mxu0 %v1010
  %1356 = vmatprep.subr.bf16.mxu0 0
  %1357 = vmatpush1.bf16.msra.mxu0 0
  %1358 = vmatprep.subr.bf16.mxu0 0
  %1359 = vmatpush1.bf16.msra.mxu0 0
  %1360 = vmatprep.subr.bf16.mxu0 0
  %1361 = vmatpush1.bf16.msra.mxu0 0
  %1362 = vmatprep.subr.bf16.mxu0 0
  %1363 = vmatpush1.bf16.msra.mxu0 0
  %1364 = vmatprep.subr.bf16.mxu0 0
  %1365 = vmatpush1.bf16.msra.mxu0 0
  %1366 = vmatprep.subr.bf16.mxu0 0
  %1367 = vmatpush1.bf16.msra.mxu0 0
  %1368 = vmatprep.subr.bf16.mxu0 0
  %1369 = vmatpush1.bf16.msra.mxu0 0
  %1370 = vmatprep.subr.bf16.mxu0 0
  %1371 = vmatpush1.bf16.msra.mxu0 0
  %1372 = vmatprep.mubr.bf16.mxu0 0
  %1373 = vmatmul.mubr.bf16.gmra.mrb[0].mxu0 %v1296
  %v1374 = vpop.f32.mrb[0].mxu0
  %v1375 = vadd.f32 0.0, %v1374
  %v1376 = vpop.f32.mrb[0].mxu0
  %v1377 = vpop.f32.mrb[0].mxu0
  %v1378 = vadd.f32 0.0, %v1377
  %v1379 = vpop.f32.mrb[0].mxu0
  %1380 = vdwg.mxu0
  %v1381 = vadd.f32 %v514, %v1375
  %v1382 = vadd.f32 %v517, %v1378
  %v1383 = vtanh.pop %v1381
  %v1384 = vtanh.pop %v1382
  %v1385 = vpack.c.bf16 %v1384, %v1383
  %1386 = vmatprep.subr.bf16.mxu0 0
  %1387 = vmatpush1.bf16.msra.mxu0 %v1103
  %1388 = vmatprep.subr.bf16.mxu0 0
  %1389 = vmatpush1.bf16.msra.mxu0 %v1104
  %1390 = vmatprep.subr.bf16.mxu0 0
  %1391 = vmatpush1.bf16.msra.mxu0 %v1105
  %1392 = vmatprep.subr.bf16.mxu0 0
  %1393 = vmatpush1.bf16.msra.mxu0 %v1106
  %1394 = vmatprep.subr.bf16.mxu0 0
  %1395 = vmatpush1.bf16.msra.mxu0 %v1107
  %1396 = vmatprep.subr.bf16.mxu0 0
  %1397 = vmatpush1.bf16.msra.mxu0 %v1108
  %1398 = vmatprep.subr.bf16.mxu0 0
  %1399 = vmatpush1.bf16.msra.mxu0 %v1109
  %1400 = vmatprep.subr.bf16.mxu0 0
  %1401 = vmatpush1.bf16.msra.mxu0 %v1110
  %1402 = vmatprep.subr.bf16.mxu0 0
  %1403 = vmatpush1.bf16.msra.mxu0 0
  %1404 = vmatprep.subr.bf16.mxu0 0
  %1405 = vmatpush1.bf16.msra.mxu0 0
  %1406 = vmatprep.subr.bf16.mxu0 0
  %1407 = vmatpush1.bf16.msra.mxu0 0
  %1408 = vmatprep.subr.bf16.mxu0 0
  %1409 = vmatpush1.bf16.msra.mxu0 0
  %1410 = vmatprep.subr.bf16.mxu0 0
  %1411 = vmatpush1.bf16.msra.mxu0 0
  %1412 = vmatprep.subr.bf16.mxu0 0
  %1413 = vmatpush1.bf16.msra.mxu0 0
  %1414 = vmatprep.subr.bf16.mxu0 0
  %1415 = vmatpush1.bf16.msra.mxu0 0
  %1416 = vmatprep.subr.bf16.mxu0 0
  %1417 = vmatpush1.bf16.msra.mxu0 0
  %1418 = vmatprep.mubr.bf16.mxu0 0
  %1419 = vmatmul.mubr.bf16.gmra.mrb[0].mxu0 %v1385
  %v1420 = vpop.f32.mrb[0].mxu0
  %v1421 = vadd.f32 %v1069, %v1420
  %v1422 = vpop.f32.mrb[0].mxu0
  %v1423 = vpop.f32.mrb[0].mxu0
  %v1424 = vadd.f32 %v1069, %v1423
  %v1425 = vpop.f32.mrb[0].mxu0
  %1426 = vdwg.mxu0
  %1427 = vst [vmem:[%s11 + $0x30] sm:$0xff] %v1421
  %1428 = vst [vmem:[%s11 + $0x38] sm:$0xff] %v1424
  %1429 = vmatprep.subr.bf16.mxu0 0
  %1430 = vmatpush1.bf16.msra.mxu0 %v1003
  %1431 = vmatprep.subr.bf16.mxu0 0
  %1432 = vmatpush1.bf16.msra.mxu0 %v1004
  %1433 = vmatprep.subr.bf16.mxu0 0
  %1434 = vmatpush1.bf16.msra.mxu0 %v1005
  %1435 = vmatprep.subr.bf16.mxu0 0
  %1436 = vmatpush1.bf16.msra.mxu0 %v1006
  %1437 = vmatprep.subr.bf16.mxu0 0
  %1438 = vmatpush1.bf16.msra.mxu0 %v1007
  %1439 = vmatprep.subr.bf16.mxu0 0
  %1440 = vmatpush1.bf16.msra.mxu0 %v1008
  %1441 = vmatprep.subr.bf16.mxu0 0
  %1442 = vmatpush1.bf16.msra.mxu0 %v1009
  %1443 = vmatprep.subr.bf16.mxu0 0
  %1444 = vmatpush1.bf16.msra.mxu0 %v1010
  %1445 = vmatprep.subr.bf16.mxu0 0
  %1446 = vmatpush1.bf16.msra.mxu0 0
  %1447 = vmatprep.subr.bf16.mxu0 0
  %1448 = vmatpush1.bf16.msra.mxu0 0
  %1449 = vmatprep.subr.bf16.mxu0 0
  %1450 = vmatpush1.bf16.msra.mxu0 0
  %1451 = vmatprep.subr.bf16.mxu0 0
  %1452 = vmatpush1.bf16.msra.mxu0 0
  %1453 = vmatprep.subr.bf16.mxu0 0
  %1454 = vmatpush1.bf16.msra.mxu0 0
  %1455 = vmatprep.subr.bf16.mxu0 0
  %1456 = vmatpush1.bf16.msra.mxu0 0
  %1457 = vmatprep.subr.bf16.mxu0 0
  %1458 = vmatpush1.bf16.msra.mxu0 0
  %1459 = vmatprep.subr.bf16.mxu0 0
  %1460 = vmatpush1.bf16.msra.mxu0 0
  %1461 = vmatprep.mubr.bf16.mxu0 0
  %1462 = vmatmul.mubr.bf16.gmra.mrb[0].mxu0 %v1385
  %v1463 = vpop.f32.mrb[0].mxu0
  %v1464 = vadd.f32 0.0, %v1463
  %v1465 = vpop.f32.mrb[0].mxu0
  %v1466 = vpop.f32.mrb[0].mxu0
  %v1467 = vadd.f32 0.0, %v1466
  %v1468 = vpop.f32.mrb[0].mxu0
  %1469 = vdwg.mxu0
  %v1470 = vadd.f32 %v522, %v1464
  %v1471 = vadd.f32 %v525, %v1467
  %v1472 = vtanh.pop %v1470
  %v1473 = vtanh.pop %v1471
  %v1474 = vpack.c.bf16 %v1473, %v1472
  %1475 = vmatprep.subr.bf16.mxu0 0
  %1476 = vmatpush1.bf16.msra.mxu0 %v1103
  %1477 = vmatprep.subr.bf16.mxu0 0
  %1478 = vmatpush1.bf16.msra.mxu0 %v1104
  %1479 = vmatprep.subr.bf16.mxu0 0
  %1480 = vmatpush1.bf16.msra.mxu0 %v1105
  %1481 = vmatprep.subr.bf16.mxu0 0
  %1482 = vmatpush1.bf16.msra.mxu0 %v1106
  %1483 = vmatprep.subr.bf16.mxu0 0
  %1484 = vmatpush1.bf16.msra.mxu0 %v1107
  %1485 = vmatprep.subr.bf16.mxu0 0
  %1486 = vmatpush1.bf16.msra.mxu0 %v1108
  %1487 = vmatprep.subr.bf16.mxu0 0
  %1488 = vmatpush1.bf16.msra.mxu0 %v1109
  %1489 = vmatprep.subr.bf16.mxu0 0
  %1490 = vmatpush1.bf16.msra.mxu0 %v1110
  %1491 = vmatprep.subr.bf16.mxu0 0
  %1492 = vmatpush1.bf16.msra.mxu0 0
  %1493 = vmatprep.subr.bf16.mxu0 0
  %1494 = vmatpush1.bf16.msra.mxu0 0
  %1495 = vmatprep.subr.bf16.mxu0 0
  %1496 = vmatpush1.bf16.msra.mxu0 0
  %1497 = vmatprep.subr.bf16.mxu0 0
  %1498 = vmatpush1.bf16.msra.mxu0 0
  %1499 = vmatprep.subr.bf16.mxu0 0
  %1500 = vmatpush1.bf16.msra.mxu0 0
  %1501 = vmatprep.subr.bf16.mxu0 0
  %1502 = vmatpush1.bf16.msra.mxu0 0
  %1503 = vmatprep.subr.bf16.mxu0 0
  %1504 = vmatpush1.bf16.msra.mxu0 0
  %1505 = vmatprep.subr.bf16.mxu0 0
  %1506 = vmatpush1.bf16.msra.mxu0 0
  %1507 = vmatprep.mubr.bf16.mxu0 0
  %1508 = vmatmul.mubr.bf16.gmra.mrb[0].mxu0 %v1474
  %v1509 = vpop.f32.mrb[0].mxu0
  %v1510 = vadd.f32 %v1069, %v1509
  %v1511 = vpop.f32.mrb[0].mxu0
  %v1512 = vpop.f32.mrb[0].mxu0
  %v1513 = vadd.f32 %v1069, %v1512
  %v1514 = vpop.f32.mrb[0].mxu0
  %1515 = vdwg.mxu0
  %1516 = vst [vmem:[%s11 + $0x40] sm:$0xff] %v1510
  %1517 = vst [vmem:[%s11 + $0x48] sm:$0xff] %v1513
  %1518 = vmatprep.subr.bf16.mxu0 0
  %1519 = vmatpush1.bf16.msra.mxu0 %v1003
  %1520 = vmatprep.subr.bf16.mxu0 0
  %1521 = vmatpush1.bf16.msra.mxu0 %v1004
  %1522 = vmatprep.subr.bf16.mxu0 0
  %1523 = vmatpush1.bf16.msra.mxu0 %v1005
  %1524 = vmatprep.subr.bf16.mxu0 0
  %1525 = vmatpush1.bf16.msra.mxu0 %v1006
  %1526 = vmatprep.subr.bf16.mxu0 0
  %1527 = vmatpush1.bf16.msra.mxu0 %v1007
  %1528 = vmatprep.subr.bf16.mxu0 0
  %1529 = vmatpush1.bf16.msra.mxu0 %v1008
  %1530 = vmatprep.subr.bf16.mxu0 0
  %1531 = vmatpush1.bf16.msra.mxu0 %v1009
  %1532 = vmatprep.subr.bf16.mxu0 0
  %1533 = vmatpush1.bf16.msra.mxu0 %v1010
  %1534 = vmatprep.subr.bf16.mxu0 0
  %1535 = vmatpush1.bf16.msra.mxu0 0
  %1536 = vmatprep.subr.bf16.mxu0 0
  %1537 = vmatpush1.bf16.msra.mxu0 0
  %1538 = vmatprep.subr.bf16.mxu0 0
  %1539 = vmatpush1.bf16.msra.mxu0 0
  %1540 = vmatprep.subr.bf16.mxu0 0
  %1541 = vmatpush1.bf16.msra.mxu0 0
  %1542 = vmatprep.subr.bf16.mxu0 0
  %1543 = vmatpush1.bf16.msra.mxu0 0
  %1544 = vmatprep.subr.bf16.mxu0 0
  %1545 = vmatpush1.bf16.msra.mxu0 0
  %1546 = vmatprep.subr.bf16.mxu0 0
  %1547 = vmatpush1.bf16.msra.mxu0 0
  %1548 = vmatprep.subr.bf16.mxu0 0
  %1549 = vmatpush1.bf16.msra.mxu0 0
  %1550 = vmatprep.mubr.bf16.mxu0 0
  %1551 = vmatmul.mubr.bf16.gmra.mrb[0].mxu0 %v1474
  %v1552 = vpop.f32.mrb[0].mxu0
  %v1553 = vadd.f32 0.0, %v1552
  %v1554 = vpop.f32.mrb[0].mxu0
  %v1555 = vpop.f32.mrb[0].mxu0
  %v1556 = vadd.f32 0.0, %v1555
  %v1557 = vpop.f32.mrb[0].mxu0
  %1558 = vdwg.mxu0
  %v1559 = vadd.f32 %v530, %v1553
  %v1560 = vadd.f32 %v533, %v1556
  %v1561 = vtanh.pop %v1559
  %v1562 = vtanh.pop %v1560
  %v1563 = vpack.c.bf16 %v1562, %v1561
  %1564 = vmatprep.subr.bf16.mxu0 0
  %1565 = vmatpush1.bf16.msra.mxu0 %v1103
  %1566 = vmatprep.subr.bf16.mxu0 0
  %1567 = vmatpush1.bf16.msra.mxu0 %v1104
  %1568 = vmatprep.subr.bf16.mxu0 0
  %1569 = vmatpush1.bf16.msra.mxu0 %v1105
  %1570 = vmatprep.subr.bf16.mxu0 0
  %1571 = vmatpush1.bf16.msra.mxu0 %v1106
  %1572 = vmatprep.subr.bf16.mxu0 0
  %1573 = vmatpush1.bf16.msra.mxu0 %v1107
  %1574 = vmatprep.subr.bf16.mxu0 0
  %1575 = vmatpush1.bf16.msra.mxu0 %v1108
  %1576 = vmatprep.subr.bf16.mxu0 0
  %1577 = vmatpush1.bf16.msra.mxu0 %v1109
  %1578 = vmatprep.subr.bf16.mxu0 0
  %1579 = vmatpush1.bf16.msra.mxu0 %v1110
  %1580 = vmatprep.subr.bf16.mxu0 0
  %1581 = vmatpush1.bf16.msra.mxu0 0
  %1582 = vmatprep.subr.bf16.mxu0 0
  %1583 = vmatpush1.bf16.msra.mxu0 0
  %1584 = vmatprep.subr.bf16.mxu0 0
  %1585 = vmatpush1.bf16.msra.mxu0 0
  %1586 = vmatprep.subr.bf16.mxu0 0
  %1587 = vmatpush1.bf16.msra.mxu0 0
  %1588 = vmatprep.subr.bf16.mxu0 0
  %1589 = vmatpush1.bf16.msra.mxu0 0
  %1590 = vmatprep.subr.bf16.mxu0 0
  %1591 = vmatpush1.bf16.msra.mxu0 0
  %1592 = vmatprep.subr.bf16.mxu0 0
  %1593 = vmatpush1.bf16.msra.mxu0 0
  %1594 = vmatprep.subr.bf16.mxu0 0
  %1595 = vmatpush1.bf16.msra.mxu0 0
  %1596 = vmatprep.mubr.bf16.mxu0 0
  %1597 = vmatmul.mubr.bf16.gmra.mrb[0].mxu0 %v1563
  %v1598 = vpop.f32.mrb[0].mxu0
  %v1599 = vadd.f32 %v1069, %v1598
  %v1600 = vpop.f32.mrb[0].mxu0
  %v1601 = vpop.f32.mrb[0].mxu0
  %v1602 = vadd.f32 %v1069, %v1601
  %v1603 = vpop.f32.mrb[0].mxu0
  %1604 = vdwg.mxu0
  %1605 = vst [vmem:[%s11 + $0x50] sm:$0xff] %v1599
  %1606 = vst [vmem:[%s11 + $0x58] sm:$0xff] %v1602
  %1607 = vmatprep.subr.bf16.mxu0 0
  %1608 = vmatpush1.bf16.msra.mxu0 %v1003
  %1609 = vmatprep.subr.bf16.mxu0 0
  %1610 = vmatpush1.bf16.msra.mxu0 %v1004
  %1611 = vmatprep.subr.bf16.mxu0 0
  %1612 = vmatpush1.bf16.msra.mxu0 %v1005
  %1613 = vmatprep.subr.bf16.mxu0 0
  %1614 = vmatpush1.bf16.msra.mxu0 %v1006
  %1615 = vmatprep.subr.bf16.mxu0 0
  %1616 = vmatpush1.bf16.msra.mxu0 %v1007
  %1617 = vmatprep.subr.bf16.mxu0 0
  %1618 = vmatpush1.bf16.msra.mxu0 %v1008
  %1619 = vmatprep.subr.bf16.mxu0 0
  %1620 = vmatpush1.bf16.msra.mxu0 %v1009
  %1621 = vmatprep.subr.bf16.mxu0 0
  %1622 = vmatpush1.bf16.msra.mxu0 %v1010
  %1623 = vmatprep.subr.bf16.mxu0 0
  %1624 = vmatpush1.bf16.msra.mxu0 0
  %1625 = vmatprep.subr.bf16.mxu0 0
  %1626 = vmatpush1.bf16.msra.mxu0 0
  %1627 = vmatprep.subr.bf16.mxu0 0
  %1628 = vmatpush1.bf16.msra.mxu0 0
  %1629 = vmatprep.subr.bf16.mxu0 0
  %1630 = vmatpush1.bf16.msra.mxu0 0
  %1631 = vmatprep.subr.bf16.mxu0 0
  %1632 = vmatpush1.bf16.msra.mxu0 0
  %1633 = vmatprep.subr.bf16.mxu0 0
  %1634 = vmatpush1.bf16.msra.mxu0 0
  %1635 = vmatprep.subr.bf16.mxu0 0
  %1636 = vmatpush1.bf16.msra.mxu0 0
  %1637 = vmatprep.subr.bf16.mxu0 0
  %1638 = vmatpush1.bf16.msra.mxu0 0
  %1639 = vmatprep.mubr.bf16.mxu0 0
  %1640 = vmatmul.mubr.bf16.gmra.mrb[0].mxu0 %v1563
  %v1641 = vpop.f32.mrb[0].mxu0
  %v1642 = vadd.f32 0.0, %v1641
  %v1643 = vpop.f32.mrb[0].mxu0
  %v1644 = vpop.f32.mrb[0].mxu0
  %v1645 = vadd.f32 0.0, %v1644
  %v1646 = vpop.f32.mrb[0].mxu0
  %1647 = vdwg.mxu0
  %v1648 = vadd.f32 %v538, %v1642
  %v1649 = vadd.f32 %v541, %v1645
  %v1650 = vtanh.pop %v1648
  %v1651 = vtanh.pop %v1649
  %v1652 = vpack.c.bf16 %v1651, %v1650
  %1653 = vmatprep.subr.bf16.mxu0 0
  %1654 = vmatpush1.bf16.msra.mxu0 %v1103
  %1655 = vmatprep.subr.bf16.mxu0 0
  %1656 = vmatpush1.bf16.msra.mxu0 %v1104
  %1657 = vmatprep.subr.bf16.mxu0 0
  %1658 = vmatpush1.bf16.msra.mxu0 %v1105
  %1659 = vmatprep.subr.bf16.mxu0 0
  %1660 = vmatpush1.bf16.msra.mxu0 %v1106
  %1661 = vmatprep.subr.bf16.mxu0 0
  %1662 = vmatpush1.bf16.msra.mxu0 %v1107
  %1663 = vmatprep.subr.bf16.mxu0 0
  %1664 = vmatpush1.bf16.msra.mxu0 %v1108
  %1665 = vmatprep.subr.bf16.mxu0 0
  %1666 = vmatpush1.bf16.msra.mxu0 %v1109
  %1667 = vmatprep.subr.bf16.mxu0 0
  %1668 = vmatpush1.bf16.msra.mxu0 %v1110
  %1669 = vmatprep.subr.bf16.mxu0 0
  %1670 = vmatpush1.bf16.msra.mxu0 0
  %1671 = vmatprep.subr.bf16.mxu0 0
  %1672 = vmatpush1.bf16.msra.mxu0 0
  %1673 = vmatprep.subr.bf16.mxu0 0
  %1674 = vmatpush1.bf16.msra.mxu0 0
  %1675 = vmatprep.subr.bf16.mxu0 0
  %1676 = vmatpush1.bf16.msra.mxu0 0
  %1677 = vmatprep.subr.bf16.mxu0 0
  %1678 = vmatpush1.bf16.msra.mxu0 0
  %1679 = vmatprep.subr.bf16.mxu0 0
  %1680 = vmatpush1.bf16.msra.mxu0 0
  %1681 = vmatprep.subr.bf16.mxu0 0
  %1682 = vmatpush1.bf16.msra.mxu0 0
  %1683 = vmatprep.subr.bf16.mxu0 0
  %1684 = vmatpush1.bf16.msra.mxu0 0
  %1685 = vmatprep.mubr.bf16.mxu0 0
  %1686 = vmatmul.mubr.bf16.gmra.mrb[0].mxu0 %v1652
  %v1687 = vpop.f32.mrb[0].mxu0
  %v1688 = vadd.f32 %v1069, %v1687
  %v1689 = vpop.f32.mrb[0].mxu0
  %v1690 = vpop.f32.mrb[0].mxu0
  %v1691 = vadd.f32 %v1069, %v1690
  %v1692 = vpop.f32.mrb[0].mxu0
  %1693 = vdwg.mxu0
  %1694 = vst [vmem:[%s11 + $0x60] sm:$0xff] %v1688
  %1695 = vst [vmem:[%s11 + $0x68] sm:$0xff] %v1691
  %1696 = vmatprep.subr.bf16.mxu0 0
  %1697 = vmatpush1.bf16.msra.mxu0 %v1003
  %1698 = vmatprep.subr.bf16.mxu0 0
  %1699 = vmatpush1.bf16.msra.mxu0 %v1004
  %1700 = vmatprep.subr.bf16.mxu0 0
  %1701 = vmatpush1.bf16.msra.mxu0 %v1005
  %1702 = vmatprep.subr.bf16.mxu0 0
  %1703 = vmatpush1.bf16.msra.mxu0 %v1006
  %1704 = vmatprep.subr.bf16.mxu0 0
  %1705 = vmatpush1.bf16.msra.mxu0 %v1007
  %1706 = vmatprep.subr.bf16.mxu0 0
  %1707 = vmatpush1.bf16.msra.mxu0 %v1008
  %1708 = vmatprep.subr.bf16.mxu0 0
  %1709 = vmatpush1.bf16.msra.mxu0 %v1009
  %1710 = vmatprep.subr.bf16.mxu0 0
  %1711 = vmatpush1.bf16.msra.mxu0 %v1010
  %1712 = vmatprep.subr.bf16.mxu0 0
  %1713 = vmatpush1.bf16.msra.mxu0 0
  %1714 = vmatprep.subr.bf16.mxu0 0
  %1715 = vmatpush1.bf16.msra.mxu0 0
  %1716 = vmatprep.subr.bf16.mxu0 0
  %1717 = vmatpush1.bf16.msra.mxu0 0
  %1718 = vmatprep.subr.bf16.mxu0 0
  %1719 = vmatpush1.bf16.msra.mxu0 0
  %1720 = vmatprep.subr.bf16.mxu0 0
  %1721 = vmatpush1.bf16.msra.mxu0 0
  %1722 = vmatprep.subr.bf16.mxu0 0
  %1723 = vmatpush1.bf16.msra.mxu0 0
  %1724 = vmatprep.subr.bf16.mxu0 0
  %1725 = vmatpush1.bf16.msra.mxu0 0
  %1726 = vmatprep.subr.bf16.mxu0 0
  %1727 = vmatpush1.bf16.msra.mxu0 0
  %1728 = vmatprep.mubr.bf16.mxu0 0
  %1729 = vmatmul.mubr.bf16.gmra.mrb[0].mxu0 %v1652
  %v1730 = vpop.f32.mrb[0].mxu0
  %v1731 = vadd.f32 0.0, %v1730
  %v1732 = vpop.f32.mrb[0].mxu0
  %v1733 = vpop.f32.mrb[0].mxu0
  %v1734 = vadd.f32 0.0, %v1733
  %v1735 = vpop.f32.mrb[0].mxu0
  %1736 = vdwg.mxu0
  %v1737 = vadd.f32 %v546, %v1731
  %v1738 = vadd.f32 %v549, %v1734
  %v1739 = vtanh.pop %v1737
  %v1740 = vtanh.pop %v1738
  %v1741 = vpack.c.bf16 %v1740, %v1739
  %1742 = vmatprep.subr.bf16.mxu0 0
  %1743 = vmatpush1.bf16.msra.mxu0 %v1103
  %1744 = vmatprep.subr.bf16.mxu0 0
  %1745 = vmatpush1.bf16.msra.mxu0 %v1104
  %1746 = vmatprep.subr.bf16.mxu0 0
  %1747 = vmatpush1.bf16.msra.mxu0 %v1105
  %1748 = vmatprep.subr.bf16.mxu0 0
  %1749 = vmatpush1.bf16.msra.mxu0 %v1106
  %1750 = vmatprep.subr.bf16.mxu0 0
  %1751 = vmatpush1.bf16.msra.mxu0 %v1107
  %1752 = vmatprep.subr.bf16.mxu0 0
  %1753 = vmatpush1.bf16.msra.mxu0 %v1108
  %1754 = vmatprep.subr.bf16.mxu0 0
  %1755 = vmatpush1.bf16.msra.mxu0 %v1109
  %1756 = vmatprep.subr.bf16.mxu0 0
  %1757 = vmatpush1.bf16.msra.mxu0 %v1110
  %1758 = vmatprep.subr.bf16.mxu0 0
  %1759 = vmatpush1.bf16.msra.mxu0 0
  %1760 = vmatprep.subr.bf16.mxu0 0
  %1761 = vmatpush1.bf16.msra.mxu0 0
  %1762 = vmatprep.subr.bf16.mxu0 0
  %1763 = vmatpush1.bf16.msra.mxu0 0
  %1764 = vmatprep.subr.bf16.mxu0 0
  %1765 = vmatpush1.bf16.msra.mxu0 0
  %1766 = vmatprep.subr.bf16.mxu0 0
  %1767 = vmatpush1.bf16.msra.mxu0 0
  %1768 = vmatprep.subr.bf16.mxu0 0
  %1769 = vmatpush1.bf16.msra.mxu0 0
  %1770 = vmatprep.subr.bf16.mxu0 0
  %1771 = vmatpush1.bf16.msra.mxu0 0
  %1772 = vmatprep.subr.bf16.mxu0 0
  %1773 = vmatpush1.bf16.msra.mxu0 0
  %1774 = vmatprep.mubr.bf16.mxu0 0
  %1775 = vmatmul.mubr.bf16.gmra.mrb[0].mxu0 %v1741
  %v1776 = vpop.f32.mrb[0].mxu0
  %v1777 = vadd.f32 %v1069, %v1776
  %v1778 = vpop.f32.mrb[0].mxu0
  %v1779 = vpop.f32.mrb[0].mxu0
  %v1780 = vadd.f32 %v1069, %v1779
  %v1781 = vpop.f32.mrb[0].mxu0
  %1782 = vdwg.mxu0
  %1783 = vst [vmem:[%s11 + $0x70] sm:$0xff] %v1777
  %1784 = vst [vmem:[%s11 + $0x78] sm:$0xff] %v1780
  // Predicated region
  $region46: #{seq2seq_forward.1} parent=0 // pred_check
    _
  $region47: #{seq2seq_forward.1} parent=0 // pred_check_branch
    %1786 = sbr.rel (0) target = $region49
  $region48: #{seq2seq_forward.1} parent=0 // pred_region
    _
  $region49: #{seq2seq_forward.1} parent=0 // pred_fallthru
    _
  // Predicated region
  $region50: #{seq2seq_forward.1} parent=0 // pred_check
    _
  $region51: #{seq2seq_forward.1} parent=0 // pred_check_branch
    %1788 = sbr.rel (0) target = $region53
  $region52: #{seq2seq_forward.1} parent=0 // pred_region
    _
  $region53: #{seq2seq_forward.1} parent=0 // pred_fallthru
    _

</llo_original>
